<compile_context>
chip_gen: v7x
topology: tpu7x:2x2x1
jax: 0.10.0
libtpu: 0.0.40
codegen_flags: <defaults>
</compile_context>

<pallas_src>
import functools

import jax
import jax.numpy as jnp
from jax.experimental import pallas as pl
from jax.experimental.pallas import tpu as pltpu

BN_EPS = 1e-5
_MIB = 1024 * 1024


# ---------------------------------------------------------------------------
# Pass 1: coordinate pooling over one (1, TC, H, W) block of NCHW x.
# ---------------------------------------------------------------------------
def _pool_kernel(x_ref, pw_ref, ph_ref):
    x = x_ref[0]                                           # (TC, H, W), native dtype
    pw_ref[0] = jnp.sum(x, axis=1, dtype=jnp.float32)      # sum over H -> (TC, W)
    ph_ref[0] = jnp.sum(x, axis=2, dtype=jnp.float32)      # sum over W -> (TC, H)


# ---------------------------------------------------------------------------
# Pass 2: tiny attention-map pass.
#   pooled sums -> means -> 1x1 conv -> BN(train stats, joint over branches)
#   -> SiLU -> per-branch 1x1 conv -> sigmoid, emitted in (N, C, P) layout.
# ---------------------------------------------------------------------------
def _attn_kernel(pw_ref, ph_ref, w0_ref, b0_ref, g_ref, be_ref,
                 w1_ref, b1_ref, w2_ref, b2_ref, aw_ref, ah_ref,
                 *, n, h, w, inv_h, inv_w, eps):
    w0 = w0_ref[...]                                       # (Cr, C)
    b0 = b0_ref[...]                                       # (Cr, 1)

    # first 1x1 conv on both branches + running sum for BN mean
    t1s, t2s = [], []
    s = jnp.zeros_like(b0)
    for i in range(n):
        t1 = jnp.dot(w0, pw_ref[i] * inv_h,
                     preferred_element_type=jnp.float32) + b0        # (Cr, W)
        t2 = jnp.dot(w0, ph_ref[i] * inv_w,
                     preferred_element_type=jnp.float32) + b0        # (Cr, H)
        t1s.append(t1)
        t2s.append(t2)
        s = s + jnp.sum(t1, axis=1, keepdims=True) \
              + jnp.sum(t2, axis=1, keepdims=True)

    cnt = jnp.float32(n * (w + h))
    mean = s / cnt                                          # (Cr, 1)

    # biased variance over the concatenated (N, Cr, W+H) tensor
    ss = jnp.zeros_like(mean)
    for i in range(n):
        d1 = t1s[i] - mean
        d2 = t2s[i] - mean
        t1s[i], t2s[i] = d1, d2
        ss = ss + jnp.sum(d1 * d1, axis=1, keepdims=True) \
                + jnp.sum(d2 * d2, axis=1, keepdims=True)
    var = ss / cnt
    scale = jax.lax.rsqrt(var + eps) * g_ref[...]           # (Cr, 1)
    shift = be_ref[...]                                     # (Cr, 1)

    w1, b1 = w1_ref[...], b1_ref[...]                       # (C, Cr), (C, 1)
    w2, b2 = w2_ref[...], b2_ref[...]                       # (C, Cr), (C, 1)
    for i in range(n):
        u1 = t1s[i] * scale + shift
        u2 = t2s[i] * scale + shift
        u1 = u1 * jax.nn.sigmoid(u1)                        # SiLU
        u2 = u2 * jax.nn.sigmoid(u2)
        aw = jax.nn.sigmoid(
            jnp.dot(w1, u1, preferred_element_type=jnp.float32) + b1)   # (C, W)
        ah = jax.nn.sigmoid(
            jnp.dot(w2, u2, preferred_element_type=jnp.float32) + b2)   # (C, H)
        aw_ref[i] = aw.astype(aw_ref.dtype)
        ah_ref[i] = ah.astype(ah_ref.dtype)


# ---------------------------------------------------------------------------
# Pass 3: gating.  out[n,c,h,w] = x[n,c,h,w] * a_w[n,c,w] * a_h[n,c,h]
# ---------------------------------------------------------------------------
def _gate_kernel(x_ref, aw_ref, ah_ref, o_ref):
    aw = aw_ref[0]                                          # (TC, W)
    ah = ah_ref[0]                                          # (TC, TH)
    o_ref[0] = (x_ref[0] * aw[:, None, :] * ah[:, :, None]).astype(o_ref.dtype)


# ---------------------------------------------------------------------------
# Tile / VMEM budget selection (generation aware, (8,128)-rule safe).
# ---------------------------------------------------------------------------
def _divisor_tiles(dim, unit):
    """Divisors of `dim` that are multiples of `unit`, plus `dim` itself (desc)."""
    cands = {dim}
    cands.update(d for d in range(unit, dim, unit) if dim % d == 0)
    return sorted(cands, reverse=True)


def _vmem_budgets():
    try:
        phys = int(getattr(pltpu.get_tpu_info(), "vmem_capacity_bytes",
                           64 * _MIB))
    except Exception:
        phys = 64 * _MIB                                     # v7x-safe fallback
    vmem_lim = min((phys * 3) // 4, 96 * _MIB)               # 96 MiB v5e/v6e, 48 MiB v7x
    gate_budget = max(vmem_lim // 6, _MIB)                   # 4 big blocks live (in+out, x2 buf)
    pool_budget = max(vmem_lim // 3, 2 * _MIB)               # only x in is streamed
    return vmem_lim, gate_budget, pool_budget


def _pick_pool_tc(C, H, W, itemsize, budget):
    cands = _divisor_tiles(C, 8)
    for tc in cands:
        if tc * H * W * itemsize <= budget:
            return tc
    return cands[-1]


def _pick_gate_tiles(N, C, H, W, itemsize, budget):
    c_cands = _divisor_tiles(C, 8)
    h_cands = _divisor_tiles(H, 128)          # full H or multiples of 128 only
    best, best_sz = (c_cands[-1], h_cands[-1]), -1
    for th in h_cands:
        for tc in c_cands:
            sz = tc * th * W * itemsize
            if sz <= budget and sz > best_sz:
                best, best_sz = (tc, th), sz
    tc, th = best
    # v7x megacore: make sure the gate grid has >= 2 steps (harmless elsewhere).
    if N * (C // tc) * (H // th) < 2:
        smaller_h = [d for d in h_cands if d < th]
        smaller_c = [d for d in c_cands if d < tc]
        if smaller_h:
            th = smaller_h[0]
        elif smaller_c:
            tc = smaller_c[0]
    return tc, th


def ca_forward(x, params, *, pool_tile_c=None, gate_tile_c=None, gate_tile_h=None):
    """CA forward on NCHW x (same layout as the PyTorch module); returns NCHW.

    params (torch (out, in) weight orientation, column biases):
      w0 (Cr, C), b0 (Cr, 1)        -- self.conv   (1x1, C -> Cr)
      gamma (Cr, 1), beta (Cr, 1)   -- self.bn     (training-mode batch stats)
      w1 (C, Cr), b1 (C, 1)         -- self.conv_1 (1x1, Cr -> C)  -> width gate
      w2 (C, Cr), b2 (C, 1)         -- self.conv_2 (1x1, Cr -> C)  -> height gate
    """
    N, C, H, W = x.shape
    assert H == W, "CA split/broadcast semantics require square spatial dims"
    dtype = x.dtype
    itemsize = jnp.dtype(dtype).itemsize

    vmem_lim, gate_budget, pool_budget = _vmem_budgets()

    if pool_tile_c is None:
        pool_tile_c = _pick_pool_tc(C, H, W, itemsize, pool_budget)
    if gate_tile_c is None or gate_tile_h is None:
        tc, th = _pick_gate_tiles(N, C, H, W, itemsize, gate_budget)
        gate_tile_c = gate_tile_c if gate_tile_c is not None else tc
        gate_tile_h = gate_tile_h if gate_tile_h is not None else th
    for t, d in ((pool_tile_c, C), (gate_tile_c, C)):
        assert d % t == 0 and (t % 8 == 0 or t == d), (t, d)
    assert H % gate_tile_h == 0 and (gate_tile_h % 128 == 0 or gate_tile_h == H)

    vmem = pl.BlockSpec(memory_space=pltpu.MemorySpace.VMEM)
    b0 = jnp.reshape(params['b0'], (-1, 1))
    gamma = jnp.reshape(params['gamma'], (-1, 1))
    beta = jnp.reshape(params['beta'], (-1, 1))
    b1 = jnp.reshape(params['b1'], (-1, 1))
    b2 = jnp.reshape(params['b2'], (-1, 1))

    # ---- pass 1: coordinate pooling (x read once) ---------------------------
    tc_p = pool_tile_c
    pool_w, pool_h = pl.pallas_call(
        _pool_kernel,
        grid=(N, C // tc_p),
        in_specs=[pl.BlockSpec((1, tc_p, H, W), lambda n, c: (n, c, 0, 0))],
        out_specs=[
            pl.BlockSpec((1, tc_p, W), lambda n, c: (n, c, 0)),
            pl.BlockSpec((1, tc_p, H), lambda n, c: (n, c, 0)),
        ],
        out_shape=[
            jax.ShapeDtypeStruct((N, C, W), jnp.float32),    # sums over H
            jax.ShapeDtypeStruct((N, C, H), jnp.float32),    # sums over W
        ],
        compiler_params=pltpu.CompilerParams(
            dimension_semantics=("parallel", "parallel"),
            vmem_limit_bytes=vmem_lim),
    )(x)

    # ---- pass 2: tiny attention maps, emitted directly in gate layout -------
    a_w, a_h = pl.pallas_call(
        functools.partial(_attn_kernel, n=N, h=H, w=W,
                          inv_h=1.0 / H, inv_w=1.0 / W, eps=BN_EPS),
        in_specs=[vmem] * 10,
        out_specs=[vmem, vmem],
        out_shape=[
            jax.ShapeDtypeStruct((N, C, W), dtype),
            jax.ShapeDtypeStruct((N, C, H), dtype),
        ],
        compiler_params=pltpu.CompilerParams(vmem_limit_bytes=vmem_lim),
    )(pool_w, pool_h, params['w0'], b0, gamma, beta,
      params['w1'], b1, params['w2'], b2)

    # ---- pass 3: gating (x read once, out written once), fully parallel -----
    tc_g, th_g = gate_tile_c, gate_tile_h
    out = pl.pallas_call(
        _gate_kernel,
        grid=(N, C // tc_g, H // th_g),
        in_specs=[
            pl.BlockSpec((1, tc_g, th_g, W), lambda n, c, k: (n, c, k, 0)),
            pl.BlockSpec((1, tc_g, W), lambda n, c, k: (n, c, 0)),
            pl.BlockSpec((1, tc_g, th_g), lambda n, c, k: (n, c, k)),
        ],
        out_specs=pl.BlockSpec((1, tc_g, th_g, W), lambda n, c, k: (n, c, k, 0)),
        out_shape=jax.ShapeDtypeStruct((N, C, H, W), dtype),
        compiler_params=pltpu.CompilerParams(
            dimension_semantics=("parallel", "parallel", "parallel"),
            vmem_limit_bytes=vmem_lim),
    )(x, a_w, a_h)
    return out


def ca_reference(x, p):
    """Plain-JAX transcription of the torch forward (NCHW), for validation."""
    x_avg = jnp.mean(x, axis=2)                          # (N, C, W) mean over H
    y_avg = jnp.mean(x, axis=3)                          # (N, C, H) mean over W
    comb = jnp.concatenate([x_avg, y_avg], axis=2)       # (N, C, W+H)
    t = jnp.einsum('oc,ncp->nop', p['w0'], comb) + p['b0'].reshape(1, -1, 1)
    mean = jnp.mean(t, axis=(0, 2), keepdims=True)
    var = jnp.mean((t - mean) ** 2, axis=(0, 2), keepdims=True)
    t = (t - mean) / jnp.sqrt(var + BN_EPS) * p['gamma'].reshape(1, -1, 1) \
        + p['beta'].reshape(1, -1, 1)
    t = t * jax.nn.sigmoid(t)                            # SiLU
    s = t.shape[2] // 2
    sp1, sp2 = t[:, :, :s], t[:, :, s:]
    a_w = jax.nn.sigmoid(jnp.einsum('cr,nrp->ncp', p['w1'], sp1)
                         + p['b1'].reshape(1, -1, 1))    # (N, C, W)
    a_h = jax.nn.sigmoid(jnp.einsum('cr,nrp->ncp', p['w2'], sp2)
                         + p['b2'].reshape(1, -1, 1))    # (N, C, H)
    return x * a_w[:, :, None, :] * a_h[:, :, :, None]


if __name__ == "__main__":
    key = jax.random.PRNGKey(0)
    N, C, H, W = 2, 16, 16, 16
    ratio = 4
    Cr = C // ratio

    ks = jax.random.split(key, 9)
    params = {
        'w0':    0.2 * jax.random.normal(ks[0], (Cr, C), jnp.float32),
        'b0':    0.1 * jax.random.normal(ks[1], (Cr, 1), jnp.float32),
        'gamma': 1.0 + 0.1 * jax.random.normal(ks[2], (Cr, 1), jnp.float32),
        'beta':  0.1 * jax.random.normal(ks[3], (Cr, 1), jnp.float32),
        'w1':    0.2 * jax.random.normal(ks[4], (C, Cr), jnp.float32),
        'b1':    0.1 * jax.random.normal(ks[5], (C, 1), jnp.float32),
        'w2':    0.2 * jax.random.normal(ks[6], (C, Cr), jnp.float32),
        'b2':    0.1 * jax.random.normal(ks[7], (C, 1), jnp.float32),
    }
    x = jax.random.normal(ks[8], (N, C, H, W), jnp.float32)

    ref = ca_reference(x, params)
    fwd = jax.jit(ca_forward,
                  static_argnames=("pool_tile_c", "gate_tile_c", "gate_tile_h"))

    # Explicit C-tiled path: exercises channel tiling in pool + gate passes.
    out = jax.block_until_ready(fwd(x, params, pool_tile_c=8, gate_tile_c=8))
    assert out.shape == x.shape
    assert jnp.allclose(out, ref, rtol=1e-4, atol=1e-4), \
        float(jnp.max(jnp.abs(out - ref)))

    # Auto-tile path.
    out_auto = jax.block_until_ready(fwd(x, params))
    assert jnp.allclose(out_auto, ref, rtol=1e-4, atol=1e-4), \
        float(jnp.max(jnp.abs(out_auto - ref)))

    # Larger square input: exercises the H-tiled gate grid (tile_h = 128) and
    # the >=2-grid-steps heuristic (N == 1).
    x2 = jax.random.normal(jax.random.PRNGKey(1), (1, C, 256, 256), jnp.float32)
    ref2 = ca_reference(x2, params)
    out2 = jax.block_until_ready(fwd(x2, params))
    assert jnp.allclose(out2, ref2, rtol=1e-4, atol=1e-4), \
        float(jnp.max(jnp.abs(out2 - ref2)))

    print("KERNEL_OK")
</pallas_src>

<mosaic_0001>
module attributes {stable_mosaic.version = 11 : i64} {
  func.func @_pool_kernel(%arg0: i32, %arg1: i32, %arg2: memref<1x8x16x16xf32, #tpu.memory_space<vmem>>, %arg3: memref<1x8x16xf32, #tpu.memory_space<vmem>>, %arg4: memref<1x8x16xf32, #tpu.memory_space<vmem>>) attributes {dimension_semantics = [#tpu.dimension_semantics<parallel>, #tpu.dimension_semantics<parallel>], iteration_bounds = array<i64: 2, 2>, scalar_prefetch = 0 : i64, scratch_operands = 0 : i64, tpu.core_type = #tpu.core_type<tc>, window_params = [{transform_indices = @transform_0, window_bounds = array<i64: 1, 8, 16, 16>}, {transform_indices = @transform_1, window_bounds = array<i64: 1, 8, 16>}, {transform_indices = @transform_2, window_bounds = array<i64: 1, 8, 16>}]} {
    %c0 = arith.constant 0 : index
    %c0_0 = arith.constant 0 : index
    %c0_1 = arith.constant 0 : index
    %c0_2 = arith.constant 0 : index
    %0 = vector.load %arg2[%c0, %c0_0, %c0_1, %c0_2] : memref<1x8x16x16xf32, #tpu.memory_space<vmem>>, vector<1x8x16x16xf32>
    %1 = vector.shape_cast %0 : vector<1x8x16x16xf32> to vector<8x16x16xf32>
    %cst = arith.constant dense<0.000000e+00> : vector<8x16xf32>
    %2 = vector.multi_reduction <add>, %1, %cst [1] : vector<8x16x16xf32> to vector<8x16xf32>
    %c0_3 = arith.constant 0 : index
    %c0_4 = arith.constant 0 : index
    %c0_5 = arith.constant 0 : index
    %3 = vector.load %arg3[%c0_3, %c0_4, %c0_5] : memref<1x8x16xf32, #tpu.memory_space<vmem>>, vector<1x8x16xf32>
    %4 = vector.shape_cast %3 : vector<1x8x16xf32> to vector<8x16xf32>
    %5 = vector.shape_cast %2 : vector<8x16xf32> to vector<1x8x16xf32>
    tpu.vector_store %arg3[%c0_3, %c0_4, %c0_5], %5 {strides = array<i32>} : memref<1x8x16xf32, #tpu.memory_space<vmem>>, vector<1x8x16xf32>,
    %cst_6 = arith.constant dense<0.000000e+00> : vector<8x16xf32>
    %6 = vector.multi_reduction <add>, %1, %cst_6 [2] : vector<8x16x16xf32> to vector<8x16xf32>
    %c0_7 = arith.constant 0 : index
    %c0_8 = arith.constant 0 : index
    %c0_9 = arith.constant 0 : index
    %7 = vector.load %arg4[%c0_7, %c0_8, %c0_9] : memref<1x8x16xf32, #tpu.memory_space<vmem>>, vector<1x8x16xf32>
    %8 = vector.shape_cast %7 : vector<1x8x16xf32> to vector<8x16xf32>
    %9 = vector.shape_cast %6 : vector<8x16xf32> to vector<1x8x16xf32>
    tpu.vector_store %arg4[%c0_7, %c0_8, %c0_9], %9 {strides = array<i32>} : memref<1x8x16xf32, #tpu.memory_space<vmem>>, vector<1x8x16xf32>,
    return
  }
  func.func @transform_0(%arg0: i32, %arg1: i32) -> (i32, i32, i32, i32) {
    %c0_i32 = arith.constant 0 : i32
    %c0_i32_0 = arith.constant 0 : i32
    %c0_i32_1 = arith.constant 0 : i32
    return %arg0, %arg1, %c0_i32, %c0_i32_0 : i32, i32, i32, i32
  }
  func.func @transform_1(%arg0: i32, %arg1: i32) -> (i32, i32, i32) {
    %c0_i32 = arith.constant 0 : i32
    %c0_i32_0 = arith.constant 0 : i32
    return %arg0, %arg1, %c0_i32 : i32, i32, i32
  }
  func.func @transform_2(%arg0: i32, %arg1: i32) -> (i32, i32, i32) {
    %c0_i32 = arith.constant 0 : i32
    %c0_i32_0 = arith.constant 0 : i32
    return %arg0, %arg1, %c0_i32 : i32, i32, i32
  }
}

module attributes {stable_mosaic.version = 11 : i64} {
  func.func @_attn_kernel(%arg0: memref<2x16x16xf32, #tpu.memory_space<vmem>>, %arg1: memref<2x16x16xf32, #tpu.memory_space<vmem>>, %arg2: memref<4x16xf32, #tpu.memory_space<vmem>>, %arg3: memref<4x1xf32, #tpu.memory_space<vmem>>, %arg4: memref<4x1xf32, #tpu.memory_space<vmem>>, %arg5: memref<4x1xf32, #tpu.memory_space<vmem>>, %arg6: memref<16x4xf32, #tpu.memory_space<vmem>>, %arg7: memref<16x1xf32, #tpu.memory_space<vmem>>, %arg8: memref<16x4xf32, #tpu.memory_space<vmem>>, %arg9: memref<16x1xf32, #tpu.memory_space<vmem>>, %arg10: memref<2x16x16xf32, #tpu.memory_space<vmem>>, %arg11: memref<2x16x16xf32, #tpu.memory_space<vmem>>) attributes {dimension_semantics = [], scalar_prefetch = 0 : i64, scratch_operands = 0 : i64, tpu.core_type = #tpu.core_type<tc>} {
    %c0 = arith.constant 0 : index
    %c0_0 = arith.constant 0 : index
    %0 = vector.load %arg2[%c0, %c0_0] : memref<4x16xf32, #tpu.memory_space<vmem>>, vector<4x16xf32>
    %c0_1 = arith.constant 0 : index
    %c0_2 = arith.constant 0 : index
    %1 = vector.load %arg3[%c0_1, %c0_2] : memref<4x1xf32, #tpu.memory_space<vmem>>, vector<4x1xf32>
    %cst = arith.constant 0.000000e+00 : f32
    %2 = vector.broadcast %cst : f32 to vector<4x1xf32>
    %c0_3 = arith.constant 0 : index
    %c0_4 = arith.constant 0 : index
    %c0_5 = arith.constant 0 : index
    %3 = vector.load %arg0[%c0_3, %c0_4, %c0_5] : memref<2x16x16xf32, #tpu.memory_space<vmem>>, vector<1x16x16xf32>
    %4 = vector.shape_cast %3 : vector<1x16x16xf32> to vector<16x16xf32>
    %cst_6 = arith.constant 6.250000e-02 : f32
    %5 = vector.broadcast %cst_6 : f32 to vector<16x16xf32>
    %6 = arith.mulf %4, %5 : vector<16x16xf32>
    %cst_7 = arith.constant dense<0.000000e+00> : vector<4x16xf32>
    %7 = tpu.matmul %0, %6, %cst_7 {dimension_numbers = #tpu.dot_dimension_numbers<[1], [0], [0], [1], [0, 0, 1, 1], [], []>} : vector<4x16xf32>, vector<16x16xf32>, vector<4x16xf32> -> vector<4x16xf32>
    %8 = vector.broadcast %1 : vector<4x1xf32> to vector<4x16xf32>
    %9 = arith.addf %7, %8 : vector<4x16xf32>
    %c0_8 = arith.constant 0 : index
    %c0_9 = arith.constant 0 : index
    %c0_10 = arith.constant 0 : index
    %10 = vector.load %arg1[%c0_8, %c0_9, %c0_10] : memref<2x16x16xf32, #tpu.memory_space<vmem>>, vector<1x16x16xf32>
    %11 = vector.shape_cast %10 : vector<1x16x16xf32> to vector<16x16xf32>
    %cst_11 = arith.constant 6.250000e-02 : f32
    %12 = vector.broadcast %cst_11 : f32 to vector<16x16xf32>
    %13 = arith.mulf %11, %12 : vector<16x16xf32>
    %cst_12 = arith.constant dense<0.000000e+00> : vector<4x16xf32>
    %14 = tpu.matmul %0, %13, %cst_12 {dimension_numbers = #tpu.dot_dimension_numbers<[1], [0], [0], [1], [0, 0, 1, 1], [], []>} : vector<4x16xf32>, vector<16x16xf32>, vector<4x16xf32> -> vector<4x16xf32>
    %15 = vector.broadcast %1 : vector<4x1xf32> to vector<4x16xf32>
    %16 = arith.addf %14, %15 : vector<4x16xf32>
    %cst_13 = arith.constant dense<0.000000e+00> : vector<4xf32>
    %17 = vector.multi_reduction <add>, %9, %cst_13 [1] : vector<4x16xf32> to vector<4xf32>
    %18 = vector.shape_cast %17 : vector<4xf32> to vector<4x1xf32>
    %19 = arith.addf %2, %18 : vector<4x1xf32>
    %cst_14 = arith.constant dense<0.000000e+00> : vector<4xf32>
    %20 = vector.multi_reduction <add>, %16, %cst_14 [1] : vector<4x16xf32> to vector<4xf32>
    %21 = vector.shape_cast %20 : vector<4xf32> to vector<4x1xf32>
    %22 = arith.addf %19, %21 : vector<4x1xf32>
    %c1 = arith.constant 1 : index
    %c0_15 = arith.constant 0 : index
    %c0_16 = arith.constant 0 : index
    %23 = vector.load %arg0[%c1, %c0_15, %c0_16] : memref<2x16x16xf32, #tpu.memory_space<vmem>>, vector<1x16x16xf32>
    %24 = vector.shape_cast %23 : vector<1x16x16xf32> to vector<16x16xf32>
    %cst_17 = arith.constant 6.250000e-02 : f32
    %25 = vector.broadcast %cst_17 : f32 to vector<16x16xf32>
    %26 = arith.mulf %24, %25 : vector<16x16xf32>
    %cst_18 = arith.constant dense<0.000000e+00> : vector<4x16xf32>
    %27 = tpu.matmul %0, %26, %cst_18 {dimension_numbers = #tpu.dot_dimension_numbers<[1], [0], [0], [1], [0, 0, 1, 1], [], []>} : vector<4x16xf32>, vector<16x16xf32>, vector<4x16xf32> -> vector<4x16xf32>
    %28 = vector.broadcast %1 : vector<4x1xf32> to vector<4x16xf32>
    %29 = arith.addf %27, %28 : vector<4x16xf32>
    %c1_19 = arith.constant 1 : index
    %c0_20 = arith.constant 0 : index
    %c0_21 = arith.constant 0 : index
    %30 = vector.load %arg1[%c1_19, %c0_20, %c0_21] : memref<2x16x16xf32, #tpu.memory_space<vmem>>, vector<1x16x16xf32>
    %31 = vector.shape_cast %30 : vector<1x16x16xf32> to vector<16x16xf32>
    %cst_22 = arith.constant 6.250000e-02 : f32
    %32 = vector.broadcast %cst_22 : f32 to vector<16x16xf32>
    %33 = arith.mulf %31, %32 : vector<16x16xf32>
    %cst_23 = arith.constant dense<0.000000e+00> : vector<4x16xf32>
    %34 = tpu.matmul %0, %33, %cst_23 {dimension_numbers = #tpu.dot_dimension_numbers<[1], [0], [0], [1], [0, 0, 1, 1], [], []>} : vector<4x16xf32>, vector<16x16xf32>, vector<4x16xf32> -> vector<4x16xf32>
    %35 = vector.broadcast %1 : vector<4x1xf32> to vector<4x16xf32>
    %36 = arith.addf %34, %35 : vector<4x16xf32>
    %cst_24 = arith.constant dense<0.000000e+00> : vector<4xf32>
    %37 = vector.multi_reduction <add>, %29, %cst_24 [1] : vector<4x16xf32> to vector<4xf32>
    %38 = vector.shape_cast %37 : vector<4xf32> to vector<4x1xf32>
    %39 = arith.addf %22, %38 : vector<4x1xf32>
    %cst_25 = arith.constant dense<0.000000e+00> : vector<4xf32>
    %40 = vector.multi_reduction <add>, %36, %cst_25 [1] : vector<4x16xf32> to vector<4xf32>
    %41 = vector.shape_cast %40 : vector<4xf32> to vector<4x1xf32>
    %42 = arith.addf %39, %41 : vector<4x1xf32>
    %cst_26 = arith.constant 6.400000e+01 : f32
    %43 = vector.broadcast %cst_26 : f32 to vector<4x1xf32>
    %44 = arith.divf %42, %43 : vector<4x1xf32>
    %cst_27 = arith.constant 0.000000e+00 : f32
    %45 = vector.broadcast %cst_27 : f32 to vector<4x1xf32>
    %46 = vector.broadcast %44 : vector<4x1xf32> to vector<4x16xf32>
    %47 = arith.subf %9, %46 : vector<4x16xf32>
    %48 = vector.broadcast %44 : vector<4x1xf32> to vector<4x16xf32>
    %49 = arith.subf %16, %48 : vector<4x16xf32>
    %50 = arith.mulf %47, %47 : vector<4x16xf32>
    %cst_28 = arith.constant dense<0.000000e+00> : vector<4xf32>
    %51 = vector.multi_reduction <add>, %50, %cst_28 [1] : vector<4x16xf32> to vector<4xf32>
    %52 = vector.shape_cast %51 : vector<4xf32> to vector<4x1xf32>
    %53 = arith.addf %45, %52 : vector<4x1xf32>
    %54 = arith.mulf %49, %49 : vector<4x16xf32>
    %cst_29 = arith.constant dense<0.000000e+00> : vector<4xf32>
    %55 = vector.multi_reduction <add>, %54, %cst_29 [1] : vector<4x16xf32> to vector<4xf32>
    %56 = vector.shape_cast %55 : vector<4xf32> to vector<4x1xf32>
    %57 = arith.addf %53, %56 : vector<4x1xf32>
    %58 = vector.broadcast %44 : vector<4x1xf32> to vector<4x16xf32>
    %59 = arith.subf %29, %58 : vector<4x16xf32>
    %60 = vector.broadcast %44 : vector<4x1xf32> to vector<4x16xf32>
    %61 = arith.subf %36, %60 : vector<4x16xf32>
    %62 = arith.mulf %59, %59 : vector<4x16xf32>
    %cst_30 = arith.constant dense<0.000000e+00> : vector<4xf32>
    %63 = vector.multi_reduction <add>, %62, %cst_30 [1] : vector<4x16xf32> to vector<4xf32>
    %64 = vector.shape_cast %63 : vector<4xf32> to vector<4x1xf32>
    %65 = arith.addf %57, %64 : vector<4x1xf32>
    %66 = arith.mulf %61, %61 : vector<4x16xf32>
    %cst_31 = arith.constant dense<0.000000e+00> : vector<4xf32>
    %67 = vector.multi_reduction <add>, %66, %cst_31 [1] : vector<4x16xf32> to vector<4xf32>
    %68 = vector.shape_cast %67 : vector<4xf32> to vector<4x1xf32>
    %69 = arith.addf %65, %68 : vector<4x1xf32>
    %cst_32 = arith.constant 6.400000e+01 : f32
    %70 = vector.broadcast %cst_32 : f32 to vector<4x1xf32>
    %71 = arith.divf %69, %70 : vector<4x1xf32>
    %cst_33 = arith.constant 9.99999974E-6 : f32
    %72 = vector.broadcast %cst_33 : f32 to vector<4x1xf32>
    %73 = arith.addf %71, %72 : vector<4x1xf32>
    %74 = math.rsqrt %73 : vector<4x1xf32>
    %c0_34 = arith.constant 0 : index
    %c0_35 = arith.constant 0 : index
    %75 = vector.load %arg4[%c0_34, %c0_35] : memref<4x1xf32, #tpu.memory_space<vmem>>, vector<4x1xf32>
    %76 = arith.mulf %74, %75 : vector<4x1xf32>
    %c0_36 = arith.constant 0 : index
    %c0_37 = arith.constant 0 : index
    %77 = vector.load %arg5[%c0_36, %c0_37] : memref<4x1xf32, #tpu.memory_space<vmem>>, vector<4x1xf32>
    %c0_38 = arith.constant 0 : index
    %c0_39 = arith.constant 0 : index
    %78 = vector.load %arg6[%c0_38, %c0_39] : memref<16x4xf32, #tpu.memory_space<vmem>>, vector<16x4xf32>
    %c0_40 = arith.constant 0 : index
    %c0_41 = arith.constant 0 : index
    %79 = vector.load %arg7[%c0_40, %c0_41] : memref<16x1xf32, #tpu.memory_space<vmem>>, vector<16x1xf32>
    %c0_42 = arith.constant 0 : index
    %c0_43 = arith.constant 0 : index
    %80 = vector.load %arg8[%c0_42, %c0_43] : memref<16x4xf32, #tpu.memory_space<vmem>>, vector<16x4xf32>
    %c0_44 = arith.constant 0 : index
    %c0_45 = arith.constant 0 : index
    %81 = vector.load %arg9[%c0_44, %c0_45] : memref<16x1xf32, #tpu.memory_space<vmem>>, vector<16x1xf32>
    %82 = vector.broadcast %76 : vector<4x1xf32> to vector<4x16xf32>
    %83 = arith.mulf %47, %82 : vector<4x16xf32>
    %84 = vector.broadcast %77 : vector<4x1xf32> to vector<4x16xf32>
    %85 = arith.addf %83, %84 : vector<4x16xf32>
    %86 = vector.broadcast %76 : vector<4x1xf32> to vector<4x16xf32>
    %87 = arith.mulf %49, %86 : vector<4x16xf32>
    %88 = vector.broadcast %77 : vector<4x1xf32> to vector<4x16xf32>
    %89 = arith.addf %87, %88 : vector<4x16xf32>
    %90 = arith.negf %85 : vector<4x16xf32>
    %91 = math.exp %90 : vector<4x16xf32>
    %cst_46 = arith.constant 1.000000e+00 : f32
    %92 = vector.broadcast %cst_46 : f32 to vector<4x16xf32>
    %93 = arith.addf %92, %91 : vector<4x16xf32>
    %94 = arith.divf %92, %93 : vector<4x16xf32>
    %95 = arith.mulf %85, %94 : vector<4x16xf32>
    %96 = arith.negf %89 : vector<4x16xf32>
    %97 = math.exp %96 : vector<4x16xf32>
    %cst_47 = arith.constant 1.000000e+00 : f32
    %98 = vector.broadcast %cst_47 : f32 to vector<4x16xf32>
    %99 = arith.addf %98, %97 : vector<4x16xf32>
    %100 = arith.divf %98, %99 : vector<4x16xf32>
    %101 = arith.mulf %89, %100 : vector<4x16xf32>
    %cst_48 = arith.constant dense<0.000000e+00> : vector<16x16xf32>
    %102 = tpu.matmul %78, %95, %cst_48 {dimension_numbers = #tpu.dot_dimension_numbers<[1], [0], [0], [1], [0, 0, 1, 1], [], []>} : vector<16x4xf32>, vector<4x16xf32>, vector<16x16xf32> -> vector<16x16xf32>
    %103 = vector.broadcast %79 : vector<16x1xf32> to vector<16x16xf32>
    %104 = arith.addf %102, %103 : vector<16x16xf32>
    %105 = arith.negf %104 : vector<16x16xf32>
    %106 = math.exp %105 : vector<16x16xf32>
    %cst_49 = arith.constant 1.000000e+00 : f32
    %107 = vector.broadcast %cst_49 : f32 to vector<16x16xf32>
    %108 = arith.addf %107, %106 : vector<16x16xf32>
    %109 = arith.divf %107, %108 : vector<16x16xf32>
    %cst_50 = arith.constant dense<0.000000e+00> : vector<16x16xf32>
    %110 = tpu.matmul %80, %101, %cst_50 {dimension_numbers = #tpu.dot_dimension_numbers<[1], [0], [0], [1], [0, 0, 1, 1], [], []>} : vector<16x4xf32>, vector<4x16xf32>, vector<16x16xf32> -> vector<16x16xf32>
    %111 = vector.broadcast %81 : vector<16x1xf32> to vector<16x16xf32>
    %112 = arith.addf %110, %111 : vector<16x16xf32>
    %113 = arith.negf %112 : vector<16x16xf32>
    %114 = math.exp %113 : vector<16x16xf32>
    %cst_51 = arith.constant 1.000000e+00 : f32
    %115 = vector.broadcast %cst_51 : f32 to vector<16x16xf32>
    %116 = arith.addf %115, %114 : vector<16x16xf32>
    %117 = arith.divf %115, %116 : vector<16x16xf32>
    %c0_52 = arith.constant 0 : index
    %c0_53 = arith.constant 0 : index
    %c0_54 = arith.constant 0 : index
    %118 = vector.load %arg10[%c0_52, %c0_53, %c0_54] : memref<2x16x16xf32, #tpu.memory_space<vmem>>, vector<1x16x16xf32>
    %119 = vector.shape_cast %118 : vector<1x16x16xf32> to vector<16x16xf32>
    %120 = vector.shape_cast %109 : vector<16x16xf32> to vector<1x16x16xf32>
    tpu.vector_store %arg10[%c0_52, %c0_53, %c0_54], %120 {strides = array<i32>} : memref<2x16x16xf32, #tpu.memory_space<vmem>>, vector<1x16x16xf32>,
    %c0_55 = arith.constant 0 : index
    %c0_56 = arith.constant 0 : index
    %c0_57 = arith.constant 0 : index
    %121 = vector.load %arg11[%c0_55, %c0_56, %c0_57] : memref<2x16x16xf32, #tpu.memory_space<vmem>>, vector<1x16x16xf32>
    %122 = vector.shape_cast %121 : vector<1x16x16xf32> to vector<16x16xf32>
    %123 = vector.shape_cast %117 : vector<16x16xf32> to vector<1x16x16xf32>
    tpu.vector_store %arg11[%c0_55, %c0_56, %c0_57], %123 {strides = array<i32>} : memref<2x16x16xf32, #tpu.memory_space<vmem>>, vector<1x16x16xf32>,
    %124 = vector.broadcast %76 : vector<4x1xf32> to vector<4x16xf32>
    %125 = arith.mulf %59, %124 : vector<4x16xf32>
    %126 = vector.broadcast %77 : vector<4x1xf32> to vector<4x16xf32>
    %127 = arith.addf %125, %126 : vector<4x16xf32>
    %128 = vector.broadcast %76 : vector<4x1xf32> to vector<4x16xf32>
    %129 = arith.mulf %61, %128 : vector<4x16xf32>
    %130 = vector.broadcast %77 : vector<4x1xf32> to vector<4x16xf32>
    %131 = arith.addf %129, %130 : vector<4x16xf32>
    %132 = arith.negf %127 : vector<4x16xf32>
    %133 = math.exp %132 : vector<4x16xf32>
    %cst_58 = arith.constant 1.000000e+00 : f32
    %134 = vector.broadcast %cst_58 : f32 to vector<4x16xf32>
    %135 = arith.addf %134, %133 : vector<4x16xf32>
    %136 = arith.divf %134, %135 : vector<4x16xf32>
    %137 = arith.mulf %127, %136 : vector<4x16xf32>
    %138 = arith.negf %131 : vector<4x16xf32>
    %139 = math.exp %138 : vector<4x16xf32>
    %cst_59 = arith.constant 1.000000e+00 : f32
    %140 = vector.broadcast %cst_59 : f32 to vector<4x16xf32>
    %141 = arith.addf %140, %139 : vector<4x16xf32>
    %142 = arith.divf %140, %141 : vector<4x16xf32>
    %143 = arith.mulf %131, %142 : vector<4x16xf32>
    %cst_60 = arith.constant dense<0.000000e+00> : vector<16x16xf32>
    %144 = tpu.matmul %78, %137, %cst_60 {dimension_numbers = #tpu.dot_dimension_numbers<[1], [0], [0], [1], [0, 0, 1, 1], [], []>} : vector<16x4xf32>, vector<4x16xf32>, vector<16x16xf32> -> vector<16x16xf32>
    %145 = vector.broadcast %79 : vector<16x1xf32> to vector<16x16xf32>
    %146 = arith.addf %144, %145 : vector<16x16xf32>
    %147 = arith.negf %146 : vector<16x16xf32>
    %148 = math.exp %147 : vector<16x16xf32>
    %cst_61 = arith.constant 1.000000e+00 : f32
    %149 = vector.broadcast %cst_61 : f32 to vector<16x16xf32>
    %150 = arith.addf %149, %148 : vector<16x16xf32>
    %151 = arith.divf %149, %150 : vector<16x16xf32>
    %cst_62 = arith.constant dense<0.000000e+00> : vector<16x16xf32>
    %152 = tpu.matmul %80, %143, %cst_62 {dimension_numbers = #tpu.dot_dimension_numbers<[1], [0], [0], [1], [0, 0, 1, 1], [], []>} : vector<16x4xf32>, vector<4x16xf32>, vector<16x16xf32> -> vector<16x16xf32>
    %153 = vector.broadcast %81 : vector<16x1xf32> to vector<16x16xf32>
    %154 = arith.addf %152, %153 : vector<16x16xf32>
    %155 = arith.negf %154 : vector<16x16xf32>
    %156 = math.exp %155 : vector<16x16xf32>
    %cst_63 = arith.constant 1.000000e+00 : f32
    %157 = vector.broadcast %cst_63 : f32 to vector<16x16xf32>
    %158 = arith.addf %157, %156 : vector<16x16xf32>
    %159 = arith.divf %157, %158 : vector<16x16xf32>
    %c1_64 = arith.constant 1 : index
    %c0_65 = arith.constant 0 : index
    %c0_66 = arith.constant 0 : index
    %160 = vector.load %arg10[%c1_64, %c0_65, %c0_66] : memref<2x16x16xf32, #tpu.memory_space<vmem>>, vector<1x16x16xf32>
    %161 = vector.shape_cast %160 : vector<1x16x16xf32> to vector<16x16xf32>
    %162 = vector.shape_cast %151 : vector<16x16xf32> to vector<1x16x16xf32>
    tpu.vector_store %arg10[%c1_64, %c0_65, %c0_66], %162 {strides = array<i32>} : memref<2x16x16xf32, #tpu.memory_space<vmem>>, vector<1x16x16xf32>,
    %c1_67 = arith.constant 1 : index
    %c0_68 = arith.constant 0 : index
    %c0_69 = arith.constant 0 : index
    %163 = vector.load %arg11[%c1_67, %c0_68, %c0_69] : memref<2x16x16xf32, #tpu.memory_space<vmem>>, vector<1x16x16xf32>
    %164 = vector.shape_cast %163 : vector<1x16x16xf32> to vector<16x16xf32>
    %165 = vector.shape_cast %159 : vector<16x16xf32> to vector<1x16x16xf32>
    tpu.vector_store %arg11[%c1_67, %c0_68, %c0_69], %165 {strides = array<i32>} : memref<2x16x16xf32, #tpu.memory_space<vmem>>, vector<1x16x16xf32>,
    return
  }
}

module attributes {stable_mosaic.version = 11 : i64} {
  func.func @_gate_kernel(%arg0: i32, %arg1: i32, %arg2: i32, %arg3: memref<1x8x16x16xf32, #tpu.memory_space<vmem>>, %arg4: memref<1x8x16xf32, #tpu.memory_space<vmem>>, %arg5: memref<1x8x16xf32, #tpu.memory_space<vmem>>, %arg6: memref<1x8x16x16xf32, #tpu.memory_space<vmem>>) attributes {dimension_semantics = [#tpu.dimension_semantics<parallel>, #tpu.dimension_semantics<parallel>, #tpu.dimension_semantics<parallel>], iteration_bounds = array<i64: 2, 2, 1>, scalar_prefetch = 0 : i64, scratch_operands = 0 : i64, tpu.core_type = #tpu.core_type<tc>, window_params = [{transform_indices = @transform_0, window_bounds = array<i64: 1, 8, 16, 16>}, {transform_indices = @transform_1, window_bounds = array<i64: 1, 8, 16>}, {transform_indices = @transform_2, window_bounds = array<i64: 1, 8, 16>}, {transform_indices = @transform_3, window_bounds = array<i64: 1, 8, 16, 16>}]} {
    %c0 = arith.constant 0 : index
    %c0_0 = arith.constant 0 : index
    %c0_1 = arith.constant 0 : index
    %0 = vector.load %arg4[%c0, %c0_0, %c0_1] : memref<1x8x16xf32, #tpu.memory_space<vmem>>, vector<1x8x16xf32>
    %1 = vector.shape_cast %0 : vector<1x8x16xf32> to vector<8x16xf32>
    %c0_2 = arith.constant 0 : index
    %c0_3 = arith.constant 0 : index
    %c0_4 = arith.constant 0 : index
    %2 = vector.load %arg5[%c0_2, %c0_3, %c0_4] : memref<1x8x16xf32, #tpu.memory_space<vmem>>, vector<1x8x16xf32>
    %3 = vector.shape_cast %2 : vector<1x8x16xf32> to vector<8x16xf32>
    %c0_5 = arith.constant 0 : index
    %c0_6 = arith.constant 0 : index
    %c0_7 = arith.constant 0 : index
    %c0_8 = arith.constant 0 : index
    %4 = vector.load %arg3[%c0_5, %c0_6, %c0_7, %c0_8] : memref<1x8x16x16xf32, #tpu.memory_space<vmem>>, vector<1x8x16x16xf32>
    %5 = vector.shape_cast %4 : vector<1x8x16x16xf32> to vector<8x16x16xf32>
    %6 = vector.shape_cast %1 : vector<8x16xf32> to vector<8x1x16xf32>
    %7 = vector.broadcast %6 : vector<8x1x16xf32> to vector<8x16x16xf32>
    %8 = arith.mulf %5, %7 : vector<8x16x16xf32>
    %9 = vector.shape_cast %3 : vector<8x16xf32> to vector<8x16x1xf32>
    %10 = vector.broadcast %9 : vector<8x16x1xf32> to vector<8x16x16xf32>
    %11 = arith.mulf %8, %10 : vector<8x16x16xf32>
    %c0_9 = arith.constant 0 : index
    %c0_10 = arith.constant 0 : index
    %c0_11 = arith.constant 0 : index
    %c0_12 = arith.constant 0 : index
    %12 = vector.load %arg6[%c0_9, %c0_10, %c0_11, %c0_12] : memref<1x8x16x16xf32, #tpu.memory_space<vmem>>, vector<1x8x16x16xf32>
    %13 = vector.shape_cast %12 : vector<1x8x16x16xf32> to vector<8x16x16xf32>
    %14 = vector.shape_cast %11 : vector<8x16x16xf32> to vector<1x8x16x16xf32>
    tpu.vector_store %arg6[%c0_9, %c0_10, %c0_11, %c0_12], %14 {strides = array<i32>} : memref<1x8x16x16xf32, #tpu.memory_space<vmem>>, vector<1x8x16x16xf32>,
    return
  }
  func.func @transform_0(%arg0: i32, %arg1: i32, %arg2: i32) -> (i32, i32, i32, i32) {
    %c0_i32 = arith.constant 0 : i32
    %c0_i32_0 = arith.constant 0 : i32
    return %arg0, %arg1, %arg2, %c0_i32 : i32, i32, i32, i32
  }
  func.func @transform_1(%arg0: i32, %arg1: i32, %arg2: i32) -> (i32, i32, i32) {
    %c0_i32 = arith.constant 0 : i32
    %c0_i32_0 = arith.constant 0 : i32
    return %arg0, %arg1, %c0_i32 : i32, i32, i32
  }
  func.func @transform_2(%arg0: i32, %arg1: i32, %arg2: i32) -> (i32, i32, i32) {
    %c0_i32 = arith.constant 0 : i32
    return %arg0, %arg1, %arg2 : i32, i32, i32
  }
  func.func @transform_3(%arg0: i32, %arg1: i32, %arg2: i32) -> (i32, i32, i32, i32) {
    %c0_i32 = arith.constant 0 : i32
    %c0_i32_0 = arith.constant 0 : i32
    return %arg0, %arg1, %arg2, %c0_i32 : i32, i32, i32, i32
  }
}

</mosaic_0001>

<llo_original>
// kernel: ca_forward.3
$region0: #{ca_forward.3}
  #allocation0 [shape = 'u32[]', space=smem, size = 0x4, offset = 0x4, fixed_abs, tag = 'smem constant byte address 0x4 - core index']
  #allocation1 [shape = 'u32[144,128]{1,0:T(1,128)}', space=vmem, size = 0x12000, scoped, tag = 'internal scratch']
  %s0 = inlined_call_operand.hbm [shape: f32[2,16,16,16], index: 0, kind: input, shape index: {}]
  %s1 = inlined_call_operand.vmem [shape: f32[2,16,16], index: 1, kind: output, shape index: {0}]
  %s2 = inlined_call_operand.vmem [shape: f32[2,16,16], index: 2, kind: output, shape index: {1}]
  %3 = xla_tuple %s1, %s2
  %s4 = sld [smem:[#allocation0]]
  $region49: #{ca_forward.3} parent=0
    _
  %s6 = ssub.s32 1, %s4
  %s7 = scalar_select 0, %s6, %s4
  $region1: #{ca_forward.3} parent=0
    #allocation2 [shape = 'u8[131072]{0}', space=vmem, size = 0x20000, scoped, tag = 'input window, operand 0']
    #allocation3 [shape = 's32[2]{0}', space=sflag, size = 0x8, scoped, tag = 'scoped memory for ca_forward.3']
    %8 = vsyncpa [#allocation3], 0
    %s9 = scalar_lea.sflag [#allocation3], 1
    %10 = vsyncpa %s9, 0
    loop: start=0, step=1, limit=6
    $region2: #{ca_forward.3} parent=1 // loop_pre_header
      _
    $region3: #{ca_forward.3} parent=1 // loop_header
      %s12 = sphi 0, %s16
      %p13 = scmp.ge.s32.totalorder %s12, 6
      %s19 = sphi 0, %s31
      %s20 = sphi 0, %s27
      %s21 = sphi 0, %s19
      %s22 = sphi 0, %s20
      %s23 = sphi 0, %s21
      %s24 = sphi 0, %s22
      %s36 = sphi 0, %s38
      %s39 = sphi 0, %s36
      %s40 = sphi 0, %s39
      %s56 = sphi 0, %s40
      %s64 = sphi 0, %s66
      %s67 = sphi 0, %s64
      %s68 = sphi 0, %s67
      %s84 = sphi 0, %s68
      %s92 = sphi 0, %s94
      %s95 = sphi 0, %s92
      %s96 = sphi 0, %s95
      %s112 = sphi 0, %s96
    $region4: #{ca_forward.3} parent=1 // loop_header_branch
      %15 = sbr.rel (%p13) target = $region8
    $region5: #{ca_forward.3} parent=1 // loop_body
      %s17 = ssub.s32 %s12, 1
      %s18 = ssub.s32 %s12, 2
      %s25 = sadd.s32 1, %s20
      %p26 = scmp.ge.s32.totalorder %s25, 2
      %s27 = scalar_select %p26, 0, %s25
      %s28 = sadd.s32 1, %s19
      %s29 = scalar_select %p26, %s28, %s19
      %p30 = scmp.ge.s32.totalorder %s29, 2
      %s31 = scalar_select %p30, 0, %s29
      %s32 = ssub.s32 %s19, %s31
      %s33 = ssub.s32 %s20, %s27
      %s34 = sor.u32 %s32, %s33
      %p35 = scmp.eq.s32.totalorder %s34, 0
      %s37 = sadd.s32 %s36, 1
      %s38 = scalar_select %p35, %s36, %s37
      %p41 = pneg %p35
      %p42 = scmp.eq.s32.totalorder %s12, 3
      %p43 = por %p41, %p42
      %p44 = scmp.ne.s32.totalorder %s36, %s39
      %p45 = scmp.eq.s32.totalorder %s12, 0
      %p46 = por %p44, %p45
      %p47 = scmp.ne.s32.totalorder %s36, %s39
      %p48 = scmp.eq.s32.totalorder %s17, 3
      %p49 = por %p47, %p48
      %p50 = scmp.ne.s32.totalorder %s39, %s40
      %p51 = scmp.eq.s32.totalorder %s17, 0
      %p52 = por %p50, %p51
      %p53 = scmp.ne.s32.totalorder %s39, %s40
      %p54 = scmp.eq.s32.totalorder %s18, 3
      %p55 = por %p53, %p54
      %p57 = scmp.ne.s32.totalorder %s40, %s56
      %p58 = scmp.eq.s32.totalorder %s18, 0
      %p59 = por %p57, %p58
      %s60 = ssub.s32 %s19, %s31
      %s61 = ssub.s32 %s20, %s27
      %s62 = sor.u32 %s60, %s61
      %p63 = scmp.eq.s32.totalorder %s62, 0
      %s65 = sadd.s32 %s64, 1
      %s66 = scalar_select %p63, %s64, %s65
      %p69 = pneg %p63
      %p70 = scmp.eq.s32.totalorder %s12, 3
      %p71 = por %p69, %p70
      %p72 = scmp.ne.s32.totalorder %s64, %s67
      %p73 = scmp.eq.s32.totalorder %s12, 0
      %p74 = por %p72, %p73
      %p75 = scmp.ne.s32.totalorder %s64, %s67
      %p76 = scmp.eq.s32.totalorder %s17, 3
      %p77 = por %p75, %p76
      %p78 = scmp.ne.s32.totalorder %s67, %s68
      %p79 = scmp.eq.s32.totalorder %s17, 0
      %p80 = por %p78, %p79
      %p81 = scmp.ne.s32.totalorder %s67, %s68
      %p82 = scmp.eq.s32.totalorder %s18, 3
      %p83 = por %p81, %p82
      %p85 = scmp.ne.s32.totalorder %s68, %s84
      %p86 = scmp.eq.s32.totalorder %s18, 0
      %p87 = por %p85, %p86
      %s88 = ssub.s32 %s19, %s31
      %s89 = ssub.s32 %s20, %s27
      %s90 = sor.u32 %s88, %s89
      %p91 = scmp.eq.s32.totalorder %s90, 0
      %s93 = sadd.s32 %s92, 1
      %s94 = scalar_select %p91, %s92, %s93
      %p97 = pneg %p91
      %p98 = scmp.eq.s32.totalorder %s12, 3
      %p99 = por %p97, %p98
      %p100 = scmp.ne.s32.totalorder %s92, %s95
      %p101 = scmp.eq.s32.totalorder %s12, 0
      %p102 = por %p100, %p101
      %p103 = scmp.ne.s32.totalorder %s92, %s95
      %p104 = scmp.eq.s32.totalorder %s17, 3
      %p105 = por %p103, %p104
      %p106 = scmp.ne.s32.totalorder %s95, %s96
      %p107 = scmp.eq.s32.totalorder %s17, 0
      %p108 = por %p106, %p107
      %p109 = scmp.ne.s32.totalorder %s95, %s96
      %p110 = scmp.eq.s32.totalorder %s18, 3
      %p111 = por %p109, %p110
      %p113 = scmp.ne.s32.totalorder %s96, %s112
      %p114 = scmp.eq.s32.totalorder %s18, 0
      %p115 = por %p113, %p114
      %p116 = scmp.le.s32.totalorder 1, %s12
      %p117 = scmp.lt.s32.totalorder %s12, 5
      %p118 = pnand %p116, %p117
      %p119 = pneg %p118
      // Predicated region
      $region9: #{ca_forward.3} parent=5 // pred_check
        _
      $region10: #{ca_forward.3} parent=5 // pred_check_branch
        %121 = sbr.rel (%p118) target = $region12
      $region11: #{ca_forward.3} parent=5 // pred_region
        %s122 = ssub.s32 %s12, 1
      $region12: #{ca_forward.3} parent=5 // pred_fallthru
        _
      %p123 = scmp.lt.s32.totalorder %s12, 4
      // Predicated region
      $region13: #{ca_forward.3} parent=5 // pred_check
        %p124 = pneg %p123
      $region14: #{ca_forward.3} parent=5 // pred_check_branch
        %126 = sbr.rel (%p124) target = $region16
      $region15: #{ca_forward.3} parent=5 // pred_region
        // Predicated region
        $region17: #{ca_forward.3} parent=15 // pred_check
          %p127 = pneg %p46
        $region18: #{ca_forward.3} parent=15 // pred_check_branch
          %129 = sbr.rel (%p127) target = $region20
        $region19: #{ca_forward.3} parent=15 // pred_region
          %s130 = sand.u32 %s36, 1
          %s131 = scalar_lea.sflag [#allocation3], %s130
          %s132 = sand.u32 %s36, 1
          %s133 = smul.addr %s132, 128
          %s134 = scalar_lea.vmem [#allocation2], %s133
          %s135 = smul.u32 8, %s20
          %s137 = ssub.s32 2048, 2048
          %138 = vsyncadd %s131, %s137
          %s139 = smul.addr %s135, 2
          %s140 = smul.addr %s19, 32
          %s141 = sadd.s32 %s139, %s140
          %s142 = smul.addr %s141, 128
          %s143 = scalar_lea.hbm %s0, %s142
          %s144 = sshll.u32 %s134, 4
          %s145 = int_to_ptr.vmem [resolvable:$true] %s144
          %150 = dma.hbm_to_vmem [thread:$0]  %s143, 2048, %s145, %s131, 128, 128, 8
        $region20: #{ca_forward.3} parent=15 // pred_fallthru
          _
      $region16: #{ca_forward.3} parent=5 // pred_fallthru
        _
      %p151 = scmp.le.s32.totalorder 1, %s12
      %p152 = scmp.lt.s32.totalorder %s12, 5
      %p153 = pnand %p151, %p152
      %p154 = pneg %p153
      // Predicated region
      $region21: #{ca_forward.3} parent=5 // pred_check
        _
      $region22: #{ca_forward.3} parent=5 // pred_check_branch
        %156 = sbr.rel (%p153) target = $region24
      $region23: #{ca_forward.3} parent=5 // pred_region
        %s157 = ssub.s32 %s12, 1
        %s158 = sand.u32 %s39, 1
        %s159 = scalar_lea.sflag [#allocation3], %s158
        %s160 = sand.u32 %s39, 1
        %s161 = smul.addr %s160, 128
        %s162 = scalar_lea.vmem [#allocation2], %s161
        // Predicated region
        $region25: #{ca_forward.3} parent=23 // pred_check
          %p163 = pneg %p52
        $region26: #{ca_forward.3} parent=23 // pred_check_branch
          %165 = sbr.rel (%p163) target = $region28
        $region27: #{ca_forward.3} parent=23 // pred_region
          %166 = dma.done %s159, 2048
        $region28: #{ca_forward.3} parent=23 // pred_fallthru
          _
        %s167 = sand.u32 %s39, 1
        %s168 = scalar_lea.sflag [#allocation3], %s167
        %s169 = sand.u32 %s39, 1
        %s170 = smul.addr %s169, 128
        %s171 = scalar_lea.vmem [#allocation2], %s170
        %p172 = pneg %p52
        %p173 = pneg %p49
        %p174 = pneg %p80
        %p175 = pneg %p77
        %p176 = scmp.lt.s32.totalorder %s21, 1
        %s177 = scalar_select %p176, %s21, 1
        %p178 = scmp.lt.s32.totalorder %s22, 1
        %s179 = scalar_select %p178, %s22, 1
        %s180 = smul.addr %s177, 2
        %s181 = sadd.s32 %s179, %s180
        %s182 = smul.addr %s181, 8
        %s183 = scalar_lea.vmem %s1, %s182
        %p184 = pneg %p108
        %p185 = pneg %p105
        %p186 = scmp.lt.s32.totalorder %s21, 1
        %s187 = scalar_select %p186, %s21, 1
        %p188 = scmp.lt.s32.totalorder %s22, 1
        %s189 = scalar_select %p188, %s22, 1
        %s190 = smul.addr %s187, 2
        %s191 = sadd.s32 %s189, %s190
        %s192 = smul.addr %s191, 8
        %s193 = scalar_lea.vmem %s2, %s192
        %s194 = smul.u32 8, %s22
        %p195 = scmp.lt.s32.totalorder %s21, 1
        %s196 = scalar_select %p195, %s21, 1
        %p197 = scmp.lt.s32.totalorder %s22, 1
        %s198 = scalar_select %p197, %s22, 1
        %s199 = smul.addr %s196, 2
        %s200 = sadd.s32 %s198, %s199
        %s201 = smul.addr %s200, 8
        %s202 = scalar_lea.vmem %s1, %s201
        %p203 = scmp.lt.s32.totalorder %s21, 1
        %s204 = scalar_select %p203, %s21, 1
        %p205 = scmp.lt.s32.totalorder %s22, 1
        %s206 = scalar_select %p205, %s22, 1
        %s207 = smul.addr %s204, 2
        %s208 = sadd.s32 %s206, %s207
        %s209 = smul.addr %s208, 8
        %s210 = scalar_lea.vmem %s2, %s209
        %v211 = vld [vmem:[%s162] sm:$0xff]
        %v212 = vld [vmem:[%s162 + $0x8] sm:$0xff]
        %v213 = vld [vmem:[%s162 + $0x10] sm:$0xff]
        %v214 = vld [vmem:[%s162 + $0x18] sm:$0xff]
        %v215 = vld [vmem:[%s162 + $0x20] sm:$0xff]
        %v216 = vld [vmem:[%s162 + $0x28] sm:$0xff]
        %v217 = vld [vmem:[%s162 + $0x30] sm:$0xff]
        %v218 = vld [vmem:[%s162 + $0x38] sm:$0xff]
        %v219 = vld [vmem:[%s162 + $0x40] sm:$0xff]
        %v220 = vld [vmem:[%s162 + $0x48] sm:$0xff]
        %v221 = vld [vmem:[%s162 + $0x50] sm:$0xff]
        %v222 = vld [vmem:[%s162 + $0x58] sm:$0xff]
        %v223 = vld [vmem:[%s162 + $0x60] sm:$0xff]
        %v224 = vld [vmem:[%s162 + $0x68] sm:$0xff]
        %v225 = vld [vmem:[%s162 + $0x70] sm:$0xff]
        %v226 = vld [vmem:[%s162 + $0x78] sm:$0xff]
        %vm227 = vcmask 130048
        %v228 = vsel %vm227, %v211, 0.0
        %v229 = vsel %vm227, %v212, 0.0
        %v230 = vadd.f32 %v228, %v229
        %v231 = vrot.slane %v230, 4
        %v232 = vadd.f32 %v230, %v231
        %v233 = vrot.slane %v232, 2
        %v234 = vadd.f32 %v232, %v233
        %v235 = vrot.slane %v234, 1
        %v236 = vadd.f32 %v234, %v235
        %v237 = vsel %vm227, %v213, 0.0
        %v238 = vsel %vm227, %v214, 0.0
        %v239 = vadd.f32 %v237, %v238
        %v240 = vrot.slane %v239, 4
        %v241 = vadd.f32 %v239, %v240
        %v242 = vrot.slane %v241, 2
        %v243 = vadd.f32 %v241, %v242
        %v244 = vrot.slane %v243, 1
        %v245 = vadd.f32 %v243, %v244
        %v246 = vsel %vm227, %v215, 0.0
        %v247 = vsel %vm227, %v216, 0.0
        %v248 = vadd.f32 %v246, %v247
        %v249 = vrot.slane %v248, 4
        %v250 = vadd.f32 %v248, %v249
        %v251 = vrot.slane %v250, 2
        %v252 = vadd.f32 %v250, %v251
        %v253 = vrot.slane %v252, 1
        %v254 = vadd.f32 %v252, %v253
        %v255 = vsel %vm227, %v217, 0.0
        %v256 = vsel %vm227, %v218, 0.0
        %v257 = vadd.f32 %v255, %v256
        %v258 = vrot.slane %v257, 4
        %v259 = vadd.f32 %v257, %v258
        %v260 = vrot.slane %v259, 2
        %v261 = vadd.f32 %v259, %v260
        %v262 = vrot.slane %v261, 1
        %v263 = vadd.f32 %v261, %v262
        %v264 = vsel %vm227, %v219, 0.0
        %v265 = vsel %vm227, %v220, 0.0
        %v266 = vadd.f32 %v264, %v265
        %v267 = vrot.slane %v266, 4
        %v268 = vadd.f32 %v266, %v267
        %v269 = vrot.slane %v268, 2
        %v270 = vadd.f32 %v268, %v269
        %v271 = vrot.slane %v270, 1
        %v272 = vadd.f32 %v270, %v271
        %v273 = vsel %vm227, %v221, 0.0
        %v274 = vsel %vm227, %v222, 0.0
        %v275 = vadd.f32 %v273, %v274
        %v276 = vrot.slane %v275, 4
        %v277 = vadd.f32 %v275, %v276
        %v278 = vrot.slane %v277, 2
        %v279 = vadd.f32 %v277, %v278
        %v280 = vrot.slane %v279, 1
        %v281 = vadd.f32 %v279, %v280
        %v282 = vsel %vm227, %v223, 0.0
        %v283 = vsel %vm227, %v224, 0.0
        %v284 = vadd.f32 %v282, %v283
        %v285 = vrot.slane %v284, 4
        %v286 = vadd.f32 %v284, %v285
        %v287 = vrot.slane %v286, 2
        %v288 = vadd.f32 %v286, %v287
        %v289 = vrot.slane %v288, 1
        %v290 = vadd.f32 %v288, %v289
        %v291 = vsel %vm227, %v225, 0.0
        %v292 = vsel %vm227, %v226, 0.0
        %v293 = vadd.f32 %v291, %v292
        %v294 = vrot.slane %v293, 4
        %v295 = vadd.f32 %v293, %v294
        %v296 = vrot.slane %v295, 2
        %v297 = vadd.f32 %v295, %v296
        %v298 = vrot.slane %v297, 1
        %v299 = vadd.f32 %v297, %v298
        %vm308 = vcmask 1041409
        %v309 = vsel %vm308, %v245, %v236
        %vm310 = vcmask 1042434
        %v311 = vsel %vm310, %v254, %v309
        %vm312 = vcmask 1043459
        %v313 = vsel %vm312, %v263, %v311
        %vm314 = vcmask 1044484
        %v315 = vsel %vm314, %v272, %v313
        %vm316 = vcmask 1045509
        %v317 = vsel %vm316, %v281, %v315
        %vm318 = vcmask 1046534
        %v319 = vsel %vm318, %v290, %v317
        %vm320 = vcmask 1047559
        %v321 = vsel %vm320, %v299, %v319
        %323 = vst.msk [vmem:[%s202] sm:$0xff] %vm227, %v321
        %324 = vadd.xlane.f32.xlu0 %v228
        %v325 = vpop.xlane.xlu0 %324
        %326 = vadd.xlane.f32.xlu0 %v229
        %v327 = vpop.xlane.xlu0 %326
        %328 = vadd.xlane.f32.xlu0 %v237
        %v329 = vpop.xlane.xlu0 %328
        %330 = vadd.xlane.f32.xlu0 %v238
        %v331 = vpop.xlane.xlu0 %330
        %332 = vadd.xlane.f32.xlu0 %v246
        %v333 = vpop.xlane.xlu0 %332
        %334 = vadd.xlane.f32.xlu0 %v247
        %v335 = vpop.xlane.xlu0 %334
        %336 = vadd.xlane.f32.xlu0 %v255
        %v337 = vpop.xlane.xlu0 %336
        %338 = vadd.xlane.f32.xlu0 %v256
        %v339 = vpop.xlane.xlu0 %338
        %340 = vadd.xlane.f32.xlu0 %v264
        %v341 = vpop.xlane.xlu0 %340
        %342 = vadd.xlane.f32.xlu0 %v265
        %v343 = vpop.xlane.xlu0 %342
        %344 = vadd.xlane.f32.xlu0 %v273
        %v345 = vpop.xlane.xlu0 %344
        %346 = vadd.xlane.f32.xlu0 %v274
        %v347 = vpop.xlane.xlu0 %346
        %348 = vadd.xlane.f32.xlu0 %v282
        %v349 = vpop.xlane.xlu0 %348
        %350 = vadd.xlane.f32.xlu0 %v283
        %v351 = vpop.xlane.xlu0 %350
        %352 = vadd.xlane.f32.xlu0 %v291
        %v353 = vpop.xlane.xlu0 %352
        %354 = vadd.xlane.f32.xlu0 %v292
        %v355 = vpop.xlane.xlu0 %354
        %v372 = vlaneseq
        %v373 = vand.u32 %v372, 127
        %v374 = vlaneseq
        %v375 = vshrl.u32 %v374, 7
        %v376 = vsub.s32 %v373, %v375
        %v377 = vrot.slane %v325, %v376
        %v378 = vadd.s32 %v373, 4294967288
        %v379 = vlaneseq
        %v380 = vshrl.u32 %v379, 7
        %v381 = vsub.s32 %v378, %v380
        %v382 = vrot.slane %v327, %v381
        %vm383 = vcmask 130112
        %v384 = vsel %vm383, %v382, %v377
        %v385 = vlaneseq
        %v386 = vshrl.u32 %v385, 7
        %v387 = vsub.s32 %v373, %v386
        %v388 = vrot.slane %v329, %v387
        %v389 = vlaneseq
        %v390 = vshrl.u32 %v389, 7
        %v391 = vsub.s32 %v378, %v390
        %v392 = vrot.slane %v331, %v391
        %v393 = vsel %vm383, %v392, %v388
        %v394 = vlaneseq
        %v395 = vshrl.u32 %v394, 7
        %v396 = vsub.s32 %v373, %v395
        %v397 = vrot.slane %v333, %v396
        %v398 = vlaneseq
        %v399 = vshrl.u32 %v398, 7
        %v400 = vsub.s32 %v378, %v399
        %v401 = vrot.slane %v335, %v400
        %v402 = vsel %vm383, %v401, %v397
        %v403 = vlaneseq
        %v404 = vshrl.u32 %v403, 7
        %v405 = vsub.s32 %v373, %v404
        %v406 = vrot.slane %v337, %v405
        %v407 = vlaneseq
        %v408 = vshrl.u32 %v407, 7
        %v409 = vsub.s32 %v378, %v408
        %v410 = vrot.slane %v339, %v409
        %v411 = vsel %vm383, %v410, %v406
        %v412 = vlaneseq
        %v413 = vshrl.u32 %v412, 7
        %v414 = vsub.s32 %v373, %v413
        %v415 = vrot.slane %v341, %v414
        %v416 = vlaneseq
        %v417 = vshrl.u32 %v416, 7
        %v418 = vsub.s32 %v378, %v417
        %v419 = vrot.slane %v343, %v418
        %v420 = vsel %vm383, %v419, %v415
        %v421 = vlaneseq
        %v422 = vshrl.u32 %v421, 7
        %v423 = vsub.s32 %v373, %v422
        %v424 = vrot.slane %v345, %v423
        %v425 = vlaneseq
        %v426 = vshrl.u32 %v425, 7
        %v427 = vsub.s32 %v378, %v426
        %v428 = vrot.slane %v347, %v427
        %v429 = vsel %vm383, %v428, %v424
        %v430 = vlaneseq
        %v431 = vshrl.u32 %v430, 7
        %v432 = vsub.s32 %v373, %v431
        %v433 = vrot.slane %v349, %v432
        %v434 = vlaneseq
        %v435 = vshrl.u32 %v434, 7
        %v436 = vsub.s32 %v378, %v435
        %v437 = vrot.slane %v351, %v436
        %v438 = vsel %vm383, %v437, %v433
        %v439 = vlaneseq
        %v440 = vshrl.u32 %v439, 7
        %v441 = vsub.s32 %v373, %v440
        %v442 = vrot.slane %v353, %v441
        %v443 = vlaneseq
        %v444 = vshrl.u32 %v443, 7
        %v445 = vsub.s32 %v378, %v444
        %v446 = vrot.slane %v355, %v445
        %v447 = vsel %vm383, %v446, %v442
        %v448 = vsel %vm308, %v393, %v384
        %v449 = vsel %vm310, %v402, %v448
        %v450 = vsel %vm312, %v411, %v449
        %v451 = vsel %vm314, %v420, %v450
        %v452 = vsel %vm316, %v429, %v451
        %v453 = vsel %vm318, %v438, %v452
        %v454 = vsel %vm320, %v447, %v453
        %456 = vst.msk [vmem:[%s210] sm:$0xff] %vm227, %v454
        %p457 = scmp.lt.s32.totalorder %s21, 1
        %s458 = scalar_select %p457, %s21, 1
        %p459 = scmp.lt.s32.totalorder %s22, 1
        %s460 = scalar_select %p459, %s22, 1
        %s461 = smul.addr %s458, 2
        %s462 = sadd.s32 %s460, %s461
        %s463 = smul.addr %s462, 8
        %s464 = scalar_lea.vmem %s1, %s463
        %p465 = scmp.lt.s32.totalorder %s21, 1
        %s466 = scalar_select %p465, %s21, 1
        %p467 = scmp.lt.s32.totalorder %s22, 1
        %s468 = scalar_select %p467, %s22, 1
        %s469 = smul.addr %s466, 2
        %s470 = sadd.s32 %s468, %s469
        %s471 = smul.addr %s470, 8
        %s472 = scalar_lea.vmem %s2, %s471
        // Predicated region
        $region29: #{ca_forward.3} parent=23 // pred_check
          %p473 = pneg %p77
        $region30: #{ca_forward.3} parent=23 // pred_check_branch
          %475 = sbr.rel (%p473) target = $region32
        $region31: #{ca_forward.3} parent=23 // pred_region
          _
        $region32: #{ca_forward.3} parent=23 // pred_fallthru
          _
        // Predicated region
        $region33: #{ca_forward.3} parent=23 // pred_check
          %p476 = pneg %p105
        $region34: #{ca_forward.3} parent=23 // pred_check_branch
          %478 = sbr.rel (%p476) target = $region36
        $region35: #{ca_forward.3} parent=23 // pred_region
          _
        $region36: #{ca_forward.3} parent=23 // pred_fallthru
          _
      $region24: #{ca_forward.3} parent=5 // pred_fallthru
        _
      %p479 = scmp.le.s32.totalorder 2, %s12
      // Predicated region
      $region37: #{ca_forward.3} parent=5 // pred_check
        %p480 = pneg %p479
      $region38: #{ca_forward.3} parent=5 // pred_check_branch
        %482 = sbr.rel (%p480) target = $region40
      $region39: #{ca_forward.3} parent=5 // pred_region
        %s483 = ssub.s32 %s12, 2
        // Predicated region
        $region41: #{ca_forward.3} parent=39 // pred_check
          %p484 = pneg %p83
        $region42: #{ca_forward.3} parent=39 // pred_check_branch
          %486 = sbr.rel (%p484) target = $region44
        $region43: #{ca_forward.3} parent=39 // pred_region
          %p487 = scmp.lt.s32.totalorder %s23, 1
          %s488 = scalar_select %p487, %s23, 1
          %p489 = scmp.lt.s32.totalorder %s24, 1
          %s490 = scalar_select %p489, %s24, 1
          %s491 = smul.addr %s488, 2
          %s492 = sadd.s32 %s490, %s491
          %s493 = smul.addr %s492, 8
          %s494 = scalar_lea.vmem %s1, %s493
        $region44: #{ca_forward.3} parent=39 // pred_fallthru
          _
        // Predicated region
        $region45: #{ca_forward.3} parent=39 // pred_check
          %p495 = pneg %p111
        $region46: #{ca_forward.3} parent=39 // pred_check_branch
          %497 = sbr.rel (%p495) target = $region48
        $region47: #{ca_forward.3} parent=39 // pred_region
          %p498 = scmp.lt.s32.totalorder %s23, 1
          %s499 = scalar_select %p498, %s23, 1
          %p500 = scmp.lt.s32.totalorder %s24, 1
          %s501 = scalar_select %p500, %s24, 1
          %s502 = smul.addr %s499, 2
          %s503 = sadd.s32 %s501, %s502
          %s504 = smul.addr %s503, 8
          %s505 = scalar_lea.vmem %s2, %s504
        $region48: #{ca_forward.3} parent=39 // pred_fallthru
          _
      $region40: #{ca_forward.3} parent=5 // pred_fallthru
        _
    $region6: #{ca_forward.3} parent=1 // loop_footer
      %s16 = sadd.s32 1, %s12
    $region7: #{ca_forward.3} parent=1 // loop_footer_branch
      %11 = sbr.rel target = $region3
    $region8: #{ca_forward.3} parent=1 // loop_exit
      _
    %506 = vsyncpa [#allocation3], 1
    %s507 = scalar_lea.sflag [#allocation3], 1
    %508 = vsyncpa %s507, 1

// kernel: ca_forward.5
$region0: #{ca_forward.5}
  #allocation0 [shape = 'u32[]', space=smem, size = 0x4, offset = 0x4, fixed_abs, tag = 'smem constant byte address 0x4 - core index']
  #allocation1 [shape = 'u32[144,128]{1,0:T(1,128)}', space=vmem, size = 0x12000, scoped, tag = 'internal scratch']
  %s0 = inlined_call_operand.vmem [shape: f32[2,16,16,16], index: 0, kind: input, shape index: {}]
  %s1 = inlined_call_operand.vmem [shape: f32[2,16,16], index: 1, kind: input, shape index: {}]
  %s2 = inlined_call_operand.vmem [shape: f32[2,16,16], index: 2, kind: input, shape index: {}]
  %s3 = inlined_call_operand.hbm [shape: f32[2,16,16,16], index: 3, kind: output, shape index: {}]
  %s4 = sld [smem:[#allocation0]]
  $region45: #{ca_forward.5} parent=0
    _
  %s6 = ssub.s32 1, %s4
  %s7 = scalar_select 0, %s6, %s4
  $region1: #{ca_forward.5} parent=0
    #allocation2 [shape = 'u8[131072]{0}', space=vmem, size = 0x20000, scoped, tag = 'output window, operand 0']
    #allocation3 [shape = 's32[2]{0}', space=sflag, size = 0x8, scoped, tag = 'scoped memory for ca_forward.5']
    %8 = vsyncpa [#allocation3], 0
    %s9 = scalar_lea.sflag [#allocation3], 1
    %10 = vsyncpa %s9, 0
    loop: start=0, step=1, limit=6
    $region2: #{ca_forward.5} parent=1 // loop_pre_header
      _
    $region3: #{ca_forward.5} parent=1 // loop_header
      %s12 = sphi 0, %s16
      %p13 = scmp.ge.s32.totalorder %s12, 6
      %s19 = sphi 0, %s38
      %s20 = sphi 0, %s34
      %s21 = sphi 0, %s30
      %s22 = sphi 0, %s19
      %s23 = sphi 0, %s20
      %s24 = sphi 0, %s21
      %s25 = sphi 0, %s22
      %s26 = sphi 0, %s23
      %s27 = sphi 0, %s24
      %s45 = sphi 0, %s47
      %s48 = sphi 0, %s45
      %s49 = sphi 0, %s48
      %s65 = sphi 0, %s49
      %s73 = sphi 0, %s75
      %s76 = sphi 0, %s73
      %s77 = sphi 0, %s76
      %s93 = sphi 0, %s77
      %s103 = sphi 0, %s105
      %s106 = sphi 0, %s103
      %s107 = sphi 0, %s106
      %s123 = sphi 0, %s107
      %s133 = sphi 0, %s135
      %s136 = sphi 0, %s133
      %s137 = sphi 0, %s136
      %s153 = sphi 0, %s137
    $region4: #{ca_forward.5} parent=1 // loop_header_branch
      %15 = sbr.rel (%p13) target = $region8
    $region5: #{ca_forward.5} parent=1 // loop_body
      %s17 = ssub.s32 %s12, 1
      %s18 = ssub.s32 %s12, 2
      %s28 = sadd.s32 1, %s21
      %p29 = scmp.ge.s32.totalorder %s28, 1
      %s30 = scalar_select %p29, 0, %s28
      %s31 = sadd.s32 1, %s20
      %s32 = scalar_select %p29, %s31, %s20
      %p33 = scmp.ge.s32.totalorder %s32, 2
      %s34 = scalar_select %p33, 0, %s32
      %s35 = sadd.s32 1, %s19
      %s36 = scalar_select %p33, %s35, %s19
      %p37 = scmp.ge.s32.totalorder %s36, 2
      %s38 = scalar_select %p37, 0, %s36
      %s39 = ssub.s32 %s19, %s38
      %s40 = ssub.s32 %s20, %s34
      %s41 = sor.u32 %s39, %s40
      %s42 = ssub.s32 %s21, %s30
      %s43 = sor.u32 %s41, %s42
      %p44 = scmp.eq.s32.totalorder %s43, 0
      %s46 = sadd.s32 %s45, 1
      %s47 = scalar_select %p44, %s45, %s46
      %p50 = pneg %p44
      %p51 = scmp.eq.s32.totalorder %s12, 3
      %p52 = por %p50, %p51
      %p53 = scmp.ne.s32.totalorder %s45, %s48
      %p54 = scmp.eq.s32.totalorder %s12, 0
      %p55 = por %p53, %p54
      %p56 = scmp.ne.s32.totalorder %s45, %s48
      %p57 = scmp.eq.s32.totalorder %s17, 3
      %p58 = por %p56, %p57
      %p59 = scmp.ne.s32.totalorder %s48, %s49
      %p60 = scmp.eq.s32.totalorder %s17, 0
      %p61 = por %p59, %p60
      %p62 = scmp.ne.s32.totalorder %s48, %s49
      %p63 = scmp.eq.s32.totalorder %s18, 3
      %p64 = por %p62, %p63
      %p66 = scmp.ne.s32.totalorder %s49, %s65
      %p67 = scmp.eq.s32.totalorder %s18, 0
      %p68 = por %p66, %p67
      %s69 = ssub.s32 %s19, %s38
      %s70 = ssub.s32 %s20, %s34
      %s71 = sor.u32 %s69, %s70
      %p72 = scmp.eq.s32.totalorder %s71, 0
      %s74 = sadd.s32 %s73, 1
      %s75 = scalar_select %p72, %s73, %s74
      %p78 = pneg %p72
      %p79 = scmp.eq.s32.totalorder %s12, 3
      %p80 = por %p78, %p79
      %p81 = scmp.ne.s32.totalorder %s73, %s76
      %p82 = scmp.eq.s32.totalorder %s12, 0
      %p83 = por %p81, %p82
      %p84 = scmp.ne.s32.totalorder %s73, %s76
      %p85 = scmp.eq.s32.totalorder %s17, 3
      %p86 = por %p84, %p85
      %p87 = scmp.ne.s32.totalorder %s76, %s77
      %p88 = scmp.eq.s32.totalorder %s17, 0
      %p89 = por %p87, %p88
      %p90 = scmp.ne.s32.totalorder %s76, %s77
      %p91 = scmp.eq.s32.totalorder %s18, 3
      %p92 = por %p90, %p91
      %p94 = scmp.ne.s32.totalorder %s77, %s93
      %p95 = scmp.eq.s32.totalorder %s18, 0
      %p96 = por %p94, %p95
      %s97 = ssub.s32 %s19, %s38
      %s98 = ssub.s32 %s20, %s34
      %s99 = sor.u32 %s97, %s98
      %s100 = ssub.s32 %s21, %s30
      %s101 = sor.u32 %s99, %s100
      %p102 = scmp.eq.s32.totalorder %s101, 0
      %s104 = sadd.s32 %s103, 1
      %s105 = scalar_select %p102, %s103, %s104
      %p108 = pneg %p102
      %p109 = scmp.eq.s32.totalorder %s12, 3
      %p110 = por %p108, %p109
      %p111 = scmp.ne.s32.totalorder %s103, %s106
      %p112 = scmp.eq.s32.totalorder %s12, 0
      %p113 = por %p111, %p112
      %p114 = scmp.ne.s32.totalorder %s103, %s106
      %p115 = scmp.eq.s32.totalorder %s17, 3
      %p116 = por %p114, %p115
      %p117 = scmp.ne.s32.totalorder %s106, %s107
      %p118 = scmp.eq.s32.totalorder %s17, 0
      %p119 = por %p117, %p118
      %p120 = scmp.ne.s32.totalorder %s106, %s107
      %p121 = scmp.eq.s32.totalorder %s18, 3
      %p122 = por %p120, %p121
      %p124 = scmp.ne.s32.totalorder %s107, %s123
      %p125 = scmp.eq.s32.totalorder %s18, 0
      %p126 = por %p124, %p125
      %s127 = ssub.s32 %s19, %s38
      %s128 = ssub.s32 %s20, %s34
      %s129 = sor.u32 %s127, %s128
      %s130 = ssub.s32 %s21, %s30
      %s131 = sor.u32 %s129, %s130
      %p132 = scmp.eq.s32.totalorder %s131, 0
      %s134 = sadd.s32 %s133, 1
      %s135 = scalar_select %p132, %s133, %s134
      %p138 = pneg %p132
      %p139 = scmp.eq.s32.totalorder %s12, 3
      %p140 = por %p138, %p139
      %p141 = scmp.ne.s32.totalorder %s133, %s136
      %p142 = scmp.eq.s32.totalorder %s12, 0
      %p143 = por %p141, %p142
      %p144 = scmp.ne.s32.totalorder %s133, %s136
      %p145 = scmp.eq.s32.totalorder %s17, 3
      %p146 = por %p144, %p145
      %p147 = scmp.ne.s32.totalorder %s136, %s137
      %p148 = scmp.eq.s32.totalorder %s17, 0
      %p149 = por %p147, %p148
      %p150 = scmp.ne.s32.totalorder %s136, %s137
      %p151 = scmp.eq.s32.totalorder %s18, 3
      %p152 = por %p150, %p151
      %p154 = scmp.ne.s32.totalorder %s137, %s153
      %p155 = scmp.eq.s32.totalorder %s18, 0
      %p156 = por %p154, %p155
      %p157 = scmp.le.s32.totalorder 1, %s12
      %p158 = scmp.lt.s32.totalorder %s12, 5
      %p159 = pnand %p157, %p158
      %p160 = pneg %p159
      // Predicated region
      $region9: #{ca_forward.5} parent=5 // pred_check
        _
      $region10: #{ca_forward.5} parent=5 // pred_check_branch
        %162 = sbr.rel (%p159) target = $region12
      $region11: #{ca_forward.5} parent=5 // pred_region
        %s163 = ssub.s32 %s12, 1
      $region12: #{ca_forward.5} parent=5 // pred_fallthru
        _
      %p164 = scmp.lt.s32.totalorder %s12, 4
      // Predicated region
      $region13: #{ca_forward.5} parent=5 // pred_check
        %p165 = pneg %p164
      $region14: #{ca_forward.5} parent=5 // pred_check_branch
        %167 = sbr.rel (%p165) target = $region16
      $region15: #{ca_forward.5} parent=5 // pred_region
        // Predicated region
        $region17: #{ca_forward.5} parent=15 // pred_check
          %p168 = pneg %p55
        $region18: #{ca_forward.5} parent=15 // pred_check_branch
          %170 = sbr.rel (%p168) target = $region20
        $region19: #{ca_forward.5} parent=15 // pred_region
          %s171 = smul.u32 8, %s20
          %s172 = smul.u32 2, %s21
          %p173 = scmp.lt.s32.totalorder %s19, 1
          %s174 = scalar_select %p173, %s19, 1
          %p175 = scmp.lt.s32.totalorder %s171, 15
          %s176 = scalar_select %p175, %s171, 15
          %p177 = scmp.lt.s32.totalorder %s172, 1
          %s178 = scalar_select %p177, %s172, 1
          %s179 = smul.addr %s176, 2
          %s180 = sadd.s32 %s178, %s179
          %s181 = smul.addr %s174, 32
          %s182 = sadd.s32 %s180, %s181
          %s183 = smul.addr %s182, 8
          %s184 = scalar_lea.vmem %s0, %s183
          %s185 = smul.u32 8, %s20
          %s186 = smul.u32 2, %s21
        $region20: #{ca_forward.5} parent=15 // pred_fallthru
          _
        // Predicated region
        $region21: #{ca_forward.5} parent=15 // pred_check
          %p187 = pneg %p83
        $region22: #{ca_forward.5} parent=15 // pred_check_branch
          %189 = sbr.rel (%p187) target = $region24
        $region23: #{ca_forward.5} parent=15 // pred_region
          %p190 = scmp.lt.s32.totalorder %s19, 1
          %s191 = scalar_select %p190, %s19, 1
          %p192 = scmp.lt.s32.totalorder %s20, 1
          %s193 = scalar_select %p192, %s20, 1
          %s194 = smul.addr %s191, 2
          %s195 = sadd.s32 %s193, %s194
          %s196 = smul.addr %s195, 8
          %s197 = scalar_lea.vmem %s1, %s196
        $region24: #{ca_forward.5} parent=15 // pred_fallthru
          _
        // Predicated region
        $region25: #{ca_forward.5} parent=15 // pred_check
          %p198 = pneg %p113
        $region26: #{ca_forward.5} parent=15 // pred_check_branch
          %200 = sbr.rel (%p198) target = $region28
        $region27: #{ca_forward.5} parent=15 // pred_region
          %p201 = scmp.lt.s32.totalorder %s19, 1
          %s202 = scalar_select %p201, %s19, 1
          %p203 = scmp.lt.s32.totalorder %s20, 1
          %s204 = scalar_select %p203, %s20, 1
          %p205 = scmp.lt.s32.totalorder %s21, 0
          %s206 = scalar_select %p205, %s21, 0
          %s207 = sadd.s32 %s206, %s204
          %s208 = smul.addr %s202, 2
          %s209 = sadd.s32 %s207, %s208
          %s210 = smul.addr %s209, 8
          %s211 = scalar_lea.vmem %s2, %s210
        $region28: #{ca_forward.5} parent=15 // pred_fallthru
          _
      $region16: #{ca_forward.5} parent=5 // pred_fallthru
        _
      %p212 = scmp.le.s32.totalorder 1, %s12
      %p213 = scmp.lt.s32.totalorder %s12, 5
      %p214 = pnand %p212, %p213
      %p215 = pneg %p214
      // Predicated region
      $region29: #{ca_forward.5} parent=5 // pred_check
        _
      $region30: #{ca_forward.5} parent=5 // pred_check_branch
        %217 = sbr.rel (%p214) target = $region32
      $region31: #{ca_forward.5} parent=5 // pred_region
        %s218 = ssub.s32 %s12, 1
        %s219 = smul.u32 8, %s23
        %s220 = smul.u32 2, %s24
        %p221 = scmp.lt.s32.totalorder %s22, 1
        %s222 = scalar_select %p221, %s22, 1
        %p223 = scmp.lt.s32.totalorder %s219, 15
        %s224 = scalar_select %p223, %s219, 15
        %p225 = scmp.lt.s32.totalorder %s220, 1
        %s226 = scalar_select %p225, %s220, 1
        %s227 = smul.addr %s224, 2
        %s228 = sadd.s32 %s226, %s227
        %s229 = smul.addr %s222, 32
        %s230 = sadd.s32 %s228, %s229
        %s231 = smul.addr %s230, 8
        %s232 = scalar_lea.vmem %s0, %s231
        %p233 = pneg %p61
        %p234 = pneg %p58
        %p235 = scmp.lt.s32.totalorder %s22, 1
        %s236 = scalar_select %p235, %s22, 1
        %p237 = scmp.lt.s32.totalorder %s23, 1
        %s238 = scalar_select %p237, %s23, 1
        %s239 = smul.addr %s236, 2
        %s240 = sadd.s32 %s238, %s239
        %s241 = smul.addr %s240, 8
        %s242 = scalar_lea.vmem %s1, %s241
        %p243 = pneg %p89
        %p244 = pneg %p86
        %p245 = scmp.lt.s32.totalorder %s22, 1
        %s246 = scalar_select %p245, %s22, 1
        %p247 = scmp.lt.s32.totalorder %s23, 1
        %s248 = scalar_select %p247, %s23, 1
        %p249 = scmp.lt.s32.totalorder %s24, 0
        %s250 = scalar_select %p249, %s24, 0
        %s251 = sadd.s32 %s250, %s248
        %s252 = smul.addr %s246, 2
        %s253 = sadd.s32 %s251, %s252
        %s254 = smul.addr %s253, 8
        %s255 = scalar_lea.vmem %s2, %s254
        %p256 = pneg %p119
        %p257 = pneg %p116
        %p258 = pneg %p149
        %p259 = pneg %p146
        %s260 = sand.u32 %s136, 1
        %s261 = scalar_lea.sflag [#allocation3], %s260
        %s262 = sand.u32 %s136, 1
        %s263 = smul.addr %s262, 128
        %s264 = scalar_lea.vmem [#allocation2], %s263
        %s265 = smul.u32 8, %s23
        %s266 = smul.u32 2, %s24
        %p267 = scmp.lt.s32.totalorder %s22, 1
        %s268 = scalar_select %p267, %s22, 1
        %p269 = scmp.lt.s32.totalorder %s265, 15
        %s270 = scalar_select %p269, %s265, 15
        %p271 = scmp.lt.s32.totalorder %s266, 1
        %s272 = scalar_select %p271, %s266, 1
        %s273 = smul.addr %s270, 2
        %s274 = sadd.s32 %s272, %s273
        %s275 = smul.addr %s268, 32
        %s276 = sadd.s32 %s274, %s275
        %s277 = smul.addr %s276, 8
        %s278 = scalar_lea.vmem %s0, %s277
        %s279 = smul.u32 8, %s23
        %s280 = smul.u32 2, %s24
        %p281 = scmp.lt.s32.totalorder %s22, 1
        %s282 = scalar_select %p281, %s22, 1
        %p283 = scmp.lt.s32.totalorder %s23, 1
        %s284 = scalar_select %p283, %s23, 1
        %s285 = smul.addr %s282, 2
        %s286 = sadd.s32 %s284, %s285
        %s287 = smul.addr %s286, 8
        %s288 = scalar_lea.vmem %s1, %s287
        %p289 = scmp.lt.s32.totalorder %s22, 1
        %s290 = scalar_select %p289, %s22, 1
        %p291 = scmp.lt.s32.totalorder %s23, 1
        %s292 = scalar_select %p291, %s23, 1
        %p293 = scmp.lt.s32.totalorder %s24, 0
        %s294 = scalar_select %p293, %s24, 0
        %s295 = sadd.s32 %s294, %s292
        %s296 = smul.addr %s290, 2
        %s297 = sadd.s32 %s295, %s296
        %s298 = smul.addr %s297, 8
        %s299 = scalar_lea.vmem %s2, %s298
        %s300 = smul.u32 8, %s23
        %s301 = smul.u32 2, %s24
        %v302 = vld [vmem:[%s288] sm:$0xff]
        %v303 = vld [vmem:[%s299] sm:$0xff]
        %v304 = vld [vmem:[%s278] sm:$0xff]
        %v305 = vld [vmem:[%s278 + $0x8] sm:$0xff]
        %v306 = vld [vmem:[%s278 + $0x10] sm:$0xff]
        %v307 = vld [vmem:[%s278 + $0x18] sm:$0xff]
        %v308 = vld [vmem:[%s278 + $0x20] sm:$0xff]
        %v309 = vld [vmem:[%s278 + $0x28] sm:$0xff]
        %v310 = vld [vmem:[%s278 + $0x30] sm:$0xff]
        %v311 = vld [vmem:[%s278 + $0x38] sm:$0xff]
        %v312 = vld [vmem:[%s278 + $0x40] sm:$0xff]
        %v313 = vld [vmem:[%s278 + $0x48] sm:$0xff]
        %v314 = vld [vmem:[%s278 + $0x50] sm:$0xff]
        %v315 = vld [vmem:[%s278 + $0x58] sm:$0xff]
        %v316 = vld [vmem:[%s278 + $0x60] sm:$0xff]
        %v317 = vld [vmem:[%s278 + $0x68] sm:$0xff]
        %v318 = vld [vmem:[%s278 + $0x70] sm:$0xff]
        %v319 = vld [vmem:[%s278 + $0x78] sm:$0xff]
        %v321 = vcombine.high %v302, %v302
        %v323 = vunpack.c.l.s4 1966171168
        %v324 = vunpack.c.0.s8 %v323
        %v325 = vlaneseq
        %v326 = vshrl.u32 %v325, 7
        %v327 = vsub.s32 %v324, %v326
        %v328 = vrot.slane %v302, %v327
        %v330 = vunpack.c.l.s4 1966171168
        %v331 = vunpack.c.0.s8 %v330
        %v332 = vlaneseq
        %v333 = vshrl.u32 %v332, 7
        %v334 = vsub.s32 %v331, %v333
        %v335 = vrot.slane %v321, %v334
        %v336 = vcombine.high %v328, %v328
        %v337 = vcombine.high %v335, %v335
        %v339 = vunpack.c.l.s4 1966171168
        %v340 = vunpack.c.0.s8 %v339
        %v341 = vlaneseq
        %v342 = vshrl.u32 %v341, 7
        %v343 = vsub.s32 %v340, %v342
        %v344 = vrot.slane %v328, %v343
        %v346 = vunpack.c.l.s4 1966171168
        %v347 = vunpack.c.0.s8 %v346
        %v348 = vlaneseq
        %v349 = vshrl.u32 %v348, 7
        %v350 = vsub.s32 %v347, %v349
        %v351 = vrot.slane %v335, %v350
        %v353 = vunpack.c.l.s4 1966171168
        %v354 = vunpack.c.0.s8 %v353
        %v355 = vlaneseq
        %v356 = vshrl.u32 %v355, 7
        %v357 = vsub.s32 %v354, %v356
        %v358 = vrot.slane %v336, %v357
        %v360 = vunpack.c.l.s4 1966171168
        %v361 = vunpack.c.0.s8 %v360
        %v362 = vlaneseq
        %v363 = vshrl.u32 %v362, 7
        %v364 = vsub.s32 %v361, %v363
        %v365 = vrot.slane %v337, %v364
        %v366 = vcombine.high %v344, %v344
        %v367 = vcombine.high %v351, %v351
        %v368 = vcombine.high %v358, %v358
        %v369 = vcombine.high %v365, %v365
        %v370 = vlaneseq
        %v371 = vshrl.u32 %v370, 7
        %v372 = vsub.s32 0, %v371
        %v373 = vrot.slane %v344, %v372
        %v374 = vlaneseq
        %v375 = vshrl.u32 %v374, 7
        %v376 = vsub.s32 0, %v375
        %v377 = vrot.slane %v358, %v376
        %v378 = vlaneseq
        %v379 = vshrl.u32 %v378, 7
        %v380 = vsub.s32 0, %v379
        %v381 = vrot.slane %v366, %v380
        %v382 = vlaneseq
        %v383 = vshrl.u32 %v382, 7
        %v384 = vsub.s32 0, %v383
        %v385 = vrot.slane %v368, %v384
        %v386 = vlaneseq
        %v387 = vshrl.u32 %v386, 7
        %v388 = vsub.s32 0, %v387
        %v389 = vrot.slane %v351, %v388
        %v390 = vlaneseq
        %v391 = vshrl.u32 %v390, 7
        %v392 = vsub.s32 0, %v391
        %v393 = vrot.slane %v365, %v392
        %v394 = vlaneseq
        %v395 = vshrl.u32 %v394, 7
        %v396 = vsub.s32 0, %v395
        %v397 = vrot.slane %v367, %v396
        %v398 = vlaneseq
        %v399 = vshrl.u32 %v398, 7
        %v400 = vsub.s32 0, %v399
        %v401 = vrot.slane %v369, %v400
        %v410 = vmul.f32 %v304, %v373
        %v411 = vmul.f32 %v305, %v373
        %v412 = vmul.f32 %v306, %v377
        %v413 = vmul.f32 %v307, %v377
        %v414 = vmul.f32 %v308, %v381
        %v415 = vmul.f32 %v309, %v381
        %v416 = vmul.f32 %v310, %v385
        %v417 = vmul.f32 %v311, %v385
        %v418 = vmul.f32 %v312, %v389
        %v419 = vmul.f32 %v313, %v389
        %v420 = vmul.f32 %v314, %v393
        %v421 = vmul.f32 %v315, %v393
        %v422 = vmul.f32 %v316, %v397
        %v423 = vmul.f32 %v317, %v397
        %v424 = vmul.f32 %v318, %v401
        %v425 = vmul.f32 %v319, %v401
        %v426 = vlaneseq
        %v427 = vshrl.u32 %v426, 7
        %v428 = vsub.s32 0, %v427
        %v429 = vrot.slane %v303, %v428
        %431 = vbcast.lane.b32.xlu0 %v429, 256
        %v432 = vpop.permute.xlu0 %431
        %s434 = sor.u32 256, 8
        %435 = vbcast.lane.b32.xlu0 %v429, %s434
        %v436 = vpop.permute.xlu0 %435
        %v437 = vlaneseq
        %v438 = vshrl.u32 %v437, 7
        %v439 = vsub.s32 1, %v438
        %v440 = vrot.slane %v303, %v439
        %442 = vbcast.lane.b32.xlu0 %v440, 256
        %v443 = vpop.permute.xlu0 %442
        %s445 = sor.u32 256, 8
        %446 = vbcast.lane.b32.xlu0 %v440, %s445
        %v447 = vpop.permute.xlu0 %446
        %v448 = vlaneseq
        %v449 = vshrl.u32 %v448, 7
        %v450 = vsub.s32 2, %v449
        %v451 = vrot.slane %v303, %v450
        %453 = vbcast.lane.b32.xlu0 %v451, 256
        %v454 = vpop.permute.xlu0 %453
        %s456 = sor.u32 256, 8
        %457 = vbcast.lane.b32.xlu0 %v451, %s456
        %v458 = vpop.permute.xlu0 %457
        %v459 = vlaneseq
        %v460 = vshrl.u32 %v459, 7
        %v461 = vsub.s32 3, %v460
        %v462 = vrot.slane %v303, %v461
        %464 = vbcast.lane.b32.xlu0 %v462, 256
        %v465 = vpop.permute.xlu0 %464
        %s467 = sor.u32 256, 8
        %468 = vbcast.lane.b32.xlu0 %v462, %s467
        %v469 = vpop.permute.xlu0 %468
        %v470 = vlaneseq
        %v471 = vshrl.u32 %v470, 7
        %v472 = vsub.s32 4, %v471
        %v473 = vrot.slane %v303, %v472
        %475 = vbcast.lane.b32.xlu0 %v473, 256
        %v476 = vpop.permute.xlu0 %475
        %s478 = sor.u32 256, 8
        %479 = vbcast.lane.b32.xlu0 %v473, %s478
        %v480 = vpop.permute.xlu0 %479
        %v481 = vlaneseq
        %v482 = vshrl.u32 %v481, 7
        %v483 = vsub.s32 5, %v482
        %v484 = vrot.slane %v303, %v483
        %486 = vbcast.lane.b32.xlu0 %v484, 256
        %v487 = vpop.permute.xlu0 %486
        %s489 = sor.u32 256, 8
        %490 = vbcast.lane.b32.xlu0 %v484, %s489
        %v491 = vpop.permute.xlu0 %490
        %v492 = vlaneseq
        %v493 = vshrl.u32 %v492, 7
        %v494 = vsub.s32 6, %v493
        %v495 = vrot.slane %v303, %v494
        %497 = vbcast.lane.b32.xlu0 %v495, 256
        %v498 = vpop.permute.xlu0 %497
        %s500 = sor.u32 256, 8
        %501 = vbcast.lane.b32.xlu0 %v495, %s500
        %v502 = vpop.permute.xlu0 %501
        %v503 = vlaneseq
        %v504 = vshrl.u32 %v503, 7
        %v505 = vsub.s32 7, %v504
        %v506 = vrot.slane %v303, %v505
        %508 = vbcast.lane.b32.xlu0 %v506, 256
        %v509 = vpop.permute.xlu0 %508
        %s511 = sor.u32 256, 8
        %512 = vbcast.lane.b32.xlu0 %v506, %s511
        %v513 = vpop.permute.xlu0 %512
        %v514 = vmul.f32 %v410, %v432
        %v515 = vmul.f32 %v411, %v436
        %v516 = vmul.f32 %v412, %v443
        %v517 = vmul.f32 %v413, %v447
        %v518 = vmul.f32 %v414, %v454
        %v519 = vmul.f32 %v415, %v458
        %v520 = vmul.f32 %v416, %v465
        %v521 = vmul.f32 %v417, %v469
        %v522 = vmul.f32 %v418, %v476
        %v523 = vmul.f32 %v419, %v480
        %v524 = vmul.f32 %v420, %v487
        %v525 = vmul.f32 %v421, %v491
        %v526 = vmul.f32 %v422, %v498
        %v527 = vmul.f32 %v423, %v502
        %v528 = vmul.f32 %v424, %v509
        %v529 = vmul.f32 %v425, %v513
        %vm530 = vcmask 130048
        %531 = vst.msk [vmem:[%s264] sm:$0xff] %vm530, %v514
        %532 = vst.msk [vmem:[%s264 + $0x8] sm:$0xff] %vm530, %v515
        %533 = vst.msk [vmem:[%s264 + $0x10] sm:$0xff] %vm530, %v516
        %534 = vst.msk [vmem:[%s264 + $0x18] sm:$0xff] %vm530, %v517
        %535 = vst.msk [vmem:[%s264 + $0x20] sm:$0xff] %vm530, %v518
        %536 = vst.msk [vmem:[%s264 + $0x28] sm:$0xff] %vm530, %v519
        %537 = vst.msk [vmem:[%s264 + $0x30] sm:$0xff] %vm530, %v520
        %538 = vst.msk [vmem:[%s264 + $0x38] sm:$0xff] %vm530, %v521
        %539 = vst.msk [vmem:[%s264 + $0x40] sm:$0xff] %vm530, %v522
        %540 = vst.msk [vmem:[%s264 + $0x48] sm:$0xff] %vm530, %v523
        %541 = vst.msk [vmem:[%s264 + $0x50] sm:$0xff] %vm530, %v524
        %542 = vst.msk [vmem:[%s264 + $0x58] sm:$0xff] %vm530, %v525
        %543 = vst.msk [vmem:[%s264 + $0x60] sm:$0xff] %vm530, %v526
        %544 = vst.msk [vmem:[%s264 + $0x68] sm:$0xff] %vm530, %v527
        %545 = vst.msk [vmem:[%s264 + $0x70] sm:$0xff] %vm530, %v528
        %546 = vst.msk [vmem:[%s264 + $0x78] sm:$0xff] %vm530, %v529
        %s547 = sand.u32 %s136, 1
        %s548 = scalar_lea.sflag [#allocation3], %s547
        %s549 = sand.u32 %s136, 1
        %s550 = smul.addr %s549, 128
        %s551 = scalar_lea.vmem [#allocation2], %s550
        // Predicated region
        $region33: #{ca_forward.5} parent=31 // pred_check
          %p552 = pneg %p146
        $region34: #{ca_forward.5} parent=31 // pred_check_branch
          %554 = sbr.rel (%p552) target = $region36
        $region35: #{ca_forward.5} parent=31 // pred_region
          %s555 = smul.u32 8, %s23
          %s556 = smul.u32 2, %s24
          %s558 = ssub.s32 2048, 2048
          %559 = vsyncadd %s548, %s558
          %s560 = smul.addr %s555, 2
          %s561 = sadd.s32 %s556, %s560
          %s562 = smul.addr %s22, 32
          %s563 = sadd.s32 %s561, %s562
          %s564 = smul.addr %s563, 128
          %s565 = scalar_lea.hbm %s3, %s564
          %s566 = sshll.u32 %s551, 4
          %s567 = int_to_ptr.vmem [resolvable:$true] %s566
          %572 = dma.vmem_to_hbm [thread:$0]  %s567, 2048, %s565, %s548, 128, 128, 8
        $region36: #{ca_forward.5} parent=31 // pred_fallthru
          _
      $region32: #{ca_forward.5} parent=5 // pred_fallthru
        _
      %p573 = scmp.le.s32.totalorder 2, %s12
      // Predicated region
      $region37: #{ca_forward.5} parent=5 // pred_check
        %p574 = pneg %p573
      $region38: #{ca_forward.5} parent=5 // pred_check_branch
        %576 = sbr.rel (%p574) target = $region40
      $region39: #{ca_forward.5} parent=5 // pred_region
        %s577 = ssub.s32 %s12, 2
        // Predicated region
        $region41: #{ca_forward.5} parent=39 // pred_check
          %p578 = pneg %p152
        $region42: #{ca_forward.5} parent=39 // pred_check_branch
          %580 = sbr.rel (%p578) target = $region44
        $region43: #{ca_forward.5} parent=39 // pred_region
          %s581 = sand.u32 %s137, 1
          %s582 = scalar_lea.sflag [#allocation3], %s581
          %s583 = sand.u32 %s137, 1
          %s584 = smul.addr %s583, 128
          %s585 = scalar_lea.vmem [#allocation2], %s584
          %586 = dma.done %s582, 2048
        $region44: #{ca_forward.5} parent=39 // pred_fallthru
          _
      $region40: #{ca_forward.5} parent=5 // pred_fallthru
        _
    $region6: #{ca_forward.5} parent=1 // loop_footer
      %s16 = sadd.s32 1, %s12
    $region7: #{ca_forward.5} parent=1 // loop_footer_branch
      %11 = sbr.rel target = $region3
    $region8: #{ca_forward.5} parent=1 // loop_exit
      _
    %587 = vsyncpa [#allocation3], 1
    %s588 = scalar_lea.sflag [#allocation3], 1
    %589 = vsyncpa %s588, 1

// kernel: ca_forward.4
$region0: #{ca_forward.4}
  #allocation0 [shape = 'u32[]', space=smem, size = 0x4, offset = 0x4, fixed_abs, tag = 'smem constant byte address 0x4 - core index']
  #allocation1 [shape = 'u32[144,128]{1,0:T(1,128)}', space=vmem, size = 0x12000, scoped, tag = 'internal scratch']
  %s0 = inlined_call_operand.vmem [shape: f32[2,16,16], index: 0, kind: input, shape index: {}]
  %s1 = inlined_call_operand.vmem [shape: f32[2,16,16], index: 1, kind: input, shape index: {}]
  %s2 = inlined_call_operand.vmem [shape: f32[4,16], index: 2, kind: input, shape index: {}]
  %s3 = inlined_call_operand.vmem [shape: f32[4,1], index: 3, kind: input, shape index: {}]
  %s4 = inlined_call_operand.vmem [shape: f32[4,1], index: 4, kind: input, shape index: {}]
  %s5 = inlined_call_operand.vmem [shape: f32[4,1], index: 5, kind: input, shape index: {}]
  %s6 = inlined_call_operand.vmem [shape: f32[16,4], index: 6, kind: input, shape index: {}]
  %s7 = inlined_call_operand.vmem [shape: f32[16,1], index: 7, kind: input, shape index: {}]
  %s8 = inlined_call_operand.vmem [shape: f32[16,4], index: 8, kind: input, shape index: {}]
  %s9 = inlined_call_operand.vmem [shape: f32[16,1], index: 9, kind: input, shape index: {}]
  %s10 = inlined_call_operand.vmem [shape: f32[2,16,16], index: 10, kind: output, shape index: {0}]
  %s11 = inlined_call_operand.vmem [shape: f32[2,16,16], index: 11, kind: output, shape index: {1}]
  %12 = xla_tuple %s10, %s11
  %s13 = sld [smem:[#allocation0]]
  $region58: #{ca_forward.4} parent=0
    _
  %s15 = ssub.s32 1, %s13
  %s16 = scalar_select 0, %s15, %s13
  // Predicated region
  $region2: #{ca_forward.4} parent=0 // pred_check
    _
  $region3: #{ca_forward.4} parent=0 // pred_check_branch
    %18 = sbr.rel (0) target = $region5
  $region4: #{ca_forward.4} parent=0 // pred_region
    _
  $region5: #{ca_forward.4} parent=0 // pred_fallthru
    _
  // Predicated region
  $region6: #{ca_forward.4} parent=0 // pred_check
    _
  $region7: #{ca_forward.4} parent=0 // pred_check_branch
    %20 = sbr.rel (0) target = $region9
  $region8: #{ca_forward.4} parent=0 // pred_region
    _
  $region9: #{ca_forward.4} parent=0 // pred_fallthru
    _
  // Predicated region
  $region10: #{ca_forward.4} parent=0 // pred_check
    _
  $region11: #{ca_forward.4} parent=0 // pred_check_branch
    %22 = sbr.rel (0) target = $region13
  $region12: #{ca_forward.4} parent=0 // pred_region
    _
  $region13: #{ca_forward.4} parent=0 // pred_fallthru
    _
  // Predicated region
  $region14: #{ca_forward.4} parent=0 // pred_check
    _
  $region15: #{ca_forward.4} parent=0 // pred_check_branch
    %24 = sbr.rel (0) target = $region17
  $region16: #{ca_forward.4} parent=0 // pred_region
    _
  $region17: #{ca_forward.4} parent=0 // pred_fallthru
    _
  // Predicated region
  $region18: #{ca_forward.4} parent=0 // pred_check
    _
  $region19: #{ca_forward.4} parent=0 // pred_check_branch
    %26 = sbr.rel (0) target = $region21
  $region20: #{ca_forward.4} parent=0 // pred_region
    _
  $region21: #{ca_forward.4} parent=0 // pred_fallthru
    _
  // Predicated region
  $region22: #{ca_forward.4} parent=0 // pred_check
    _
  $region23: #{ca_forward.4} parent=0 // pred_check_branch
    %28 = sbr.rel (0) target = $region25
  $region24: #{ca_forward.4} parent=0 // pred_region
    _
  $region25: #{ca_forward.4} parent=0 // pred_fallthru
    _
  // Predicated region
  $region26: #{ca_forward.4} parent=0 // pred_check
    _
  $region27: #{ca_forward.4} parent=0 // pred_check_branch
    %30 = sbr.rel (0) target = $region29
  $region28: #{ca_forward.4} parent=0 // pred_region
    _
  $region29: #{ca_forward.4} parent=0 // pred_fallthru
    _
  // Predicated region
  $region30: #{ca_forward.4} parent=0 // pred_check
    _
  $region31: #{ca_forward.4} parent=0 // pred_check_branch
    %32 = sbr.rel (0) target = $region33
  $region32: #{ca_forward.4} parent=0 // pred_region
    _
  $region33: #{ca_forward.4} parent=0 // pred_fallthru
    _
  // Predicated region
  $region34: #{ca_forward.4} parent=0 // pred_check
    _
  $region35: #{ca_forward.4} parent=0 // pred_check_branch
    %34 = sbr.rel (0) target = $region37
  $region36: #{ca_forward.4} parent=0 // pred_region
    _
  $region37: #{ca_forward.4} parent=0 // pred_fallthru
    _
  // Predicated region
  $region38: #{ca_forward.4} parent=0 // pred_check
    _
  $region39: #{ca_forward.4} parent=0 // pred_check_branch
    %36 = sbr.rel (0) target = $region41
  $region40: #{ca_forward.4} parent=0 // pred_region
    _
  $region41: #{ca_forward.4} parent=0 // pred_fallthru
    _
  %v37 = vld [vmem:[%s2] sm:$0xf]
  %v38 = vld [vmem:[%s3] sm:$0xf]
  %v39 = vld [vmem:[%s0] sm:$0xff]
  %v40 = vld [vmem:[%s0 + $0x8] sm:$0xff]
  %v41 = vmul.f32 %v39, 0.0625
  %v42 = vmul.f32 %v40, 0.0625
  %44 = vset.pattern.permute.xlu0 0
  %45 = vperm.xlu0 %44, %v38
  %v46 = vpop.permute.xlu0 %45
  %vm48 = vcmask 130048
  %v50 = vsel %vm48, %v37, 0
  %52 = vmatprep.subr.mxu0 0.0
  %53 = vmatpush1.msra.mxu0 %v41
  %54 = vmatprep.subr.mxu0 0.0
  %55 = vmatpush1.msra.mxu0 %v42
  %56 = vmatprep.subr.mxu0 0.0
  %57 = vmatpush1.msra.mxu0 0.0
  %58 = vmatprep.subr.mxu0 0.0
  %59 = vmatpush1.msra.mxu0 0.0
  %60 = vmatprep.subr.mxu0 0.0
  %61 = vmatpush1.msra.mxu0 0.0
  %62 = vmatprep.subr.mxu0 0.0
  %63 = vmatpush1.msra.mxu0 0.0
  %64 = vmatprep.subr.mxu0 0.0
  %65 = vmatpush1.msra.mxu0 0.0
  %66 = vmatprep.subr.mxu0 0.0
  %67 = vmatpush1.msra.mxu0 0.0
  %68 = vmatprep.subr.mxu0 0.0
  %69 = vmatpush1.msra.mxu0 0.0
  %70 = vmatprep.subr.mxu0 0.0
  %71 = vmatpush1.msra.mxu0 0.0
  %72 = vmatprep.subr.mxu0 0.0
  %73 = vmatpush1.msra.mxu0 0.0
  %74 = vmatprep.subr.mxu0 0.0
  %75 = vmatpush1.msra.mxu0 0.0
  %76 = vmatprep.subr.mxu0 0.0
  %77 = vmatpush1.msra.mxu0 0.0
  %78 = vmatprep.subr.mxu0 0.0
  %79 = vmatpush1.msra.mxu0 0.0
  %80 = vmatprep.subr.mxu0 0.0
  %81 = vmatpush1.msra.mxu0 0.0
  %82 = vmatprep.subr.mxu0 0.0
  %83 = vmatpush1.msra.mxu0 0.0
  %84 = vmatprep.subr.mxu0 0.0
  %85 = vmatpush1.msra.mxu0 0.0
  %86 = vmatprep.subr.mxu0 0.0
  %87 = vmatpush1.msra.mxu0 0.0
  %88 = vmatprep.subr.mxu0 0.0
  %89 = vmatpush1.msra.mxu0 0.0
  %90 = vmatprep.subr.mxu0 0.0
  %91 = vmatpush1.msra.mxu0 0.0
  %92 = vmatprep.subr.mxu0 0.0
  %93 = vmatpush1.msra.mxu0 0.0
  %94 = vmatprep.subr.mxu0 0.0
  %95 = vmatpush1.msra.mxu0 0.0
  %96 = vmatprep.subr.mxu0 0.0
  %97 = vmatpush1.msra.mxu0 0.0
  %98 = vmatprep.subr.mxu0 0.0
  %99 = vmatpush1.msra.mxu0 0.0
  %100 = vmatprep.subr.mxu0 0.0
  %101 = vmatpush1.msra.mxu0 0.0
  %102 = vmatprep.subr.mxu0 0.0
  %103 = vmatpush1.msra.mxu0 0.0
  %104 = vmatprep.subr.mxu0 0.0
  %105 = vmatpush1.msra.mxu0 0.0
  %106 = vmatprep.subr.mxu0 0.0
  %107 = vmatpush1.msra.mxu0 0.0
  %108 = vmatprep.subr.mxu0 0.0
  %109 = vmatpush1.msra.mxu0 0.0
  %110 = vmatprep.subr.mxu0 0.0
  %111 = vmatpush1.msra.mxu0 0.0
  %112 = vmatprep.subr.mxu0 0.0
  %113 = vmatpush1.msra.mxu0 0.0
  %114 = vmatprep.subr.mxu0 0.0
  %115 = vmatpush1.msra.mxu0 0.0
  %116 = vmatprep.mubr.f32.mxu0 0.0
  %117 = vmatmul.mubr.f32.gmra.mrb[0].mxu0 %v50
  %v118 = vpop.f32.mrb[0].mxu0
  %v119 = vadd.f32 %v46, %v118
  %v120 = vpop.f32.mrb[0].mxu0
  %121 = vdwg.mxu0
  %v122 = vld [vmem:[%s1] sm:$0xff]
  %v123 = vld [vmem:[%s1 + $0x8] sm:$0xff]
  %v124 = vmul.f32 %v122, 0.0625
  %v125 = vmul.f32 %v123, 0.0625
  %126 = vmatprep.subr.mxu0 0.0
  %127 = vmatpush1.msra.mxu0 %v124
  %128 = vmatprep.subr.mxu0 0.0
  %129 = vmatpush1.msra.mxu0 %v125
  %130 = vmatprep.subr.mxu0 0.0
  %131 = vmatpush1.msra.mxu0 0.0
  %132 = vmatprep.subr.mxu0 0.0
  %133 = vmatpush1.msra.mxu0 0.0
  %134 = vmatprep.subr.mxu0 0.0
  %135 = vmatpush1.msra.mxu0 0.0
  %136 = vmatprep.subr.mxu0 0.0
  %137 = vmatpush1.msra.mxu0 0.0
  %138 = vmatprep.subr.mxu0 0.0
  %139 = vmatpush1.msra.mxu0 0.0
  %140 = vmatprep.subr.mxu0 0.0
  %141 = vmatpush1.msra.mxu0 0.0
  %142 = vmatprep.subr.mxu0 0.0
  %143 = vmatpush1.msra.mxu0 0.0
  %144 = vmatprep.subr.mxu0 0.0
  %145 = vmatpush1.msra.mxu0 0.0
  %146 = vmatprep.subr.mxu0 0.0
  %147 = vmatpush1.msra.mxu0 0.0
  %148 = vmatprep.subr.mxu0 0.0
  %149 = vmatpush1.msra.mxu0 0.0
  %150 = vmatprep.subr.mxu0 0.0
  %151 = vmatpush1.msra.mxu0 0.0
  %152 = vmatprep.subr.mxu0 0.0
  %153 = vmatpush1.msra.mxu0 0.0
  %154 = vmatprep.subr.mxu0 0.0
  %155 = vmatpush1.msra.mxu0 0.0
  %156 = vmatprep.subr.mxu0 0.0
  %157 = vmatpush1.msra.mxu0 0.0
  %158 = vmatprep.subr.mxu0 0.0
  %159 = vmatpush1.msra.mxu0 0.0
  %160 = vmatprep.subr.mxu0 0.0
  %161 = vmatpush1.msra.mxu0 0.0
  %162 = vmatprep.subr.mxu0 0.0
  %163 = vmatpush1.msra.mxu0 0.0
  %164 = vmatprep.subr.mxu0 0.0
  %165 = vmatpush1.msra.mxu0 0.0
  %166 = vmatprep.subr.mxu0 0.0
  %167 = vmatpush1.msra.mxu0 0.0
  %168 = vmatprep.subr.mxu0 0.0
  %169 = vmatpush1.msra.mxu0 0.0
  %170 = vmatprep.subr.mxu0 0.0
  %171 = vmatpush1.msra.mxu0 0.0
  %172 = vmatprep.subr.mxu0 0.0
  %173 = vmatpush1.msra.mxu0 0.0
  %174 = vmatprep.subr.mxu0 0.0
  %175 = vmatpush1.msra.mxu0 0.0
  %176 = vmatprep.subr.mxu0 0.0
  %177 = vmatpush1.msra.mxu0 0.0
  %178 = vmatprep.subr.mxu0 0.0
  %179 = vmatpush1.msra.mxu0 0.0
  %180 = vmatprep.subr.mxu0 0.0
  %181 = vmatpush1.msra.mxu0 0.0
  %182 = vmatprep.subr.mxu0 0.0
  %183 = vmatpush1.msra.mxu0 0.0
  %184 = vmatprep.subr.mxu0 0.0
  %185 = vmatpush1.msra.mxu0 0.0
  %186 = vmatprep.subr.mxu0 0.0
  %187 = vmatpush1.msra.mxu0 0.0
  %188 = vmatprep.subr.mxu0 0.0
  %189 = vmatpush1.msra.mxu0 0.0
  %190 = vmatprep.mubr.f32.mxu0 0.0
  %191 = vmatmul.mubr.f32.gmra.mrb[0].mxu0 %v50
  %v192 = vpop.f32.mrb[0].mxu0
  %v193 = vadd.f32 %v46, %v192
  %v194 = vpop.f32.mrb[0].mxu0
  %195 = vdwg.mxu0
  %vm196 = vcmask 125952
  %v197 = vsel %vm196, %v119, 0.0
  %198 = vadd.xlane.f32.xlu0 %v197
  %v199 = vpop.xlane.xlu0 %198
  %v200 = vadd.f32 %v199, 0.0
  %v201 = vsel %vm196, %v193, 0.0
  %202 = vadd.xlane.f32.xlu0 %v201
  %v203 = vpop.xlane.xlu0 %202
  %v204 = vadd.f32 %v200, %v203
  %s205 = scalar_lea.vmem %s0, 16
  %v206 = vld [vmem:[%s205] sm:$0xff]
  %v207 = vld [vmem:[%s205 + $0x8] sm:$0xff]
  %v208 = vmul.f32 %v206, 0.0625
  %v209 = vmul.f32 %v207, 0.0625
  %210 = vmatprep.subr.mxu0 0.0
  %211 = vmatpush1.msra.mxu0 %v208
  %212 = vmatprep.subr.mxu0 0.0
  %213 = vmatpush1.msra.mxu0 %v209
  %214 = vmatprep.subr.mxu0 0.0
  %215 = vmatpush1.msra.mxu0 0.0
  %216 = vmatprep.subr.mxu0 0.0
  %217 = vmatpush1.msra.mxu0 0.0
  %218 = vmatprep.subr.mxu0 0.0
  %219 = vmatpush1.msra.mxu0 0.0
  %220 = vmatprep.subr.mxu0 0.0
  %221 = vmatpush1.msra.mxu0 0.0
  %222 = vmatprep.subr.mxu0 0.0
  %223 = vmatpush1.msra.mxu0 0.0
  %224 = vmatprep.subr.mxu0 0.0
  %225 = vmatpush1.msra.mxu0 0.0
  %226 = vmatprep.subr.mxu0 0.0
  %227 = vmatpush1.msra.mxu0 0.0
  %228 = vmatprep.subr.mxu0 0.0
  %229 = vmatpush1.msra.mxu0 0.0
  %230 = vmatprep.subr.mxu0 0.0
  %231 = vmatpush1.msra.mxu0 0.0
  %232 = vmatprep.subr.mxu0 0.0
  %233 = vmatpush1.msra.mxu0 0.0
  %234 = vmatprep.subr.mxu0 0.0
  %235 = vmatpush1.msra.mxu0 0.0
  %236 = vmatprep.subr.mxu0 0.0
  %237 = vmatpush1.msra.mxu0 0.0
  %238 = vmatprep.subr.mxu0 0.0
  %239 = vmatpush1.msra.mxu0 0.0
  %240 = vmatprep.subr.mxu0 0.0
  %241 = vmatpush1.msra.mxu0 0.0
  %242 = vmatprep.subr.mxu0 0.0
  %243 = vmatpush1.msra.mxu0 0.0
  %244 = vmatprep.subr.mxu0 0.0
  %245 = vmatpush1.msra.mxu0 0.0
  %246 = vmatprep.subr.mxu0 0.0
  %247 = vmatpush1.msra.mxu0 0.0
  %248 = vmatprep.subr.mxu0 0.0
  %249 = vmatpush1.msra.mxu0 0.0
  %250 = vmatprep.subr.mxu0 0.0
  %251 = vmatpush1.msra.mxu0 0.0
  %252 = vmatprep.subr.mxu0 0.0
  %253 = vmatpush1.msra.mxu0 0.0
  %254 = vmatprep.subr.mxu0 0.0
  %255 = vmatpush1.msra.mxu0 0.0
  %256 = vmatprep.subr.mxu0 0.0
  %257 = vmatpush1.msra.mxu0 0.0
  %258 = vmatprep.subr.mxu0 0.0
  %259 = vmatpush1.msra.mxu0 0.0
  %260 = vmatprep.subr.mxu0 0.0
  %261 = vmatpush1.msra.mxu0 0.0
  %262 = vmatprep.subr.mxu0 0.0
  %263 = vmatpush1.msra.mxu0 0.0
  %264 = vmatprep.subr.mxu0 0.0
  %265 = vmatpush1.msra.mxu0 0.0
  %266 = vmatprep.subr.mxu0 0.0
  %267 = vmatpush1.msra.mxu0 0.0
  %268 = vmatprep.subr.mxu0 0.0
  %269 = vmatpush1.msra.mxu0 0.0
  %270 = vmatprep.subr.mxu0 0.0
  %271 = vmatpush1.msra.mxu0 0.0
  %272 = vmatprep.subr.mxu0 0.0
  %273 = vmatpush1.msra.mxu0 0.0
  %274 = vmatprep.mubr.f32.mxu0 0.0
  %275 = vmatmul.mubr.f32.gmra.mrb[0].mxu0 %v50
  %v276 = vpop.f32.mrb[0].mxu0
  %v277 = vadd.f32 %v46, %v276
  %v278 = vpop.f32.mrb[0].mxu0
  %279 = vdwg.mxu0
  %s280 = scalar_lea.vmem %s1, 16
  %v281 = vld [vmem:[%s280] sm:$0xff]
  %v282 = vld [vmem:[%s280 + $0x8] sm:$0xff]
  %v283 = vmul.f32 %v281, 0.0625
  %v284 = vmul.f32 %v282, 0.0625
  %285 = vmatprep.subr.mxu0 0.0
  %286 = vmatpush1.msra.mxu0 %v283
  %287 = vmatprep.subr.mxu0 0.0
  %288 = vmatpush1.msra.mxu0 %v284
  %289 = vmatprep.subr.mxu0 0.0
  %290 = vmatpush1.msra.mxu0 0.0
  %291 = vmatprep.subr.mxu0 0.0
  %292 = vmatpush1.msra.mxu0 0.0
  %293 = vmatprep.subr.mxu0 0.0
  %294 = vmatpush1.msra.mxu0 0.0
  %295 = vmatprep.subr.mxu0 0.0
  %296 = vmatpush1.msra.mxu0 0.0
  %297 = vmatprep.subr.mxu0 0.0
  %298 = vmatpush1.msra.mxu0 0.0
  %299 = vmatprep.subr.mxu0 0.0
  %300 = vmatpush1.msra.mxu0 0.0
  %301 = vmatprep.subr.mxu0 0.0
  %302 = vmatpush1.msra.mxu0 0.0
  %303 = vmatprep.subr.mxu0 0.0
  %304 = vmatpush1.msra.mxu0 0.0
  %305 = vmatprep.subr.mxu0 0.0
  %306 = vmatpush1.msra.mxu0 0.0
  %307 = vmatprep.subr.mxu0 0.0
  %308 = vmatpush1.msra.mxu0 0.0
  %309 = vmatprep.subr.mxu0 0.0
  %310 = vmatpush1.msra.mxu0 0.0
  %311 = vmatprep.subr.mxu0 0.0
  %312 = vmatpush1.msra.mxu0 0.0
  %313 = vmatprep.subr.mxu0 0.0
  %314 = vmatpush1.msra.mxu0 0.0
  %315 = vmatprep.subr.mxu0 0.0
  %316 = vmatpush1.msra.mxu0 0.0
  %317 = vmatprep.subr.mxu0 0.0
  %318 = vmatpush1.msra.mxu0 0.0
  %319 = vmatprep.subr.mxu0 0.0
  %320 = vmatpush1.msra.mxu0 0.0
  %321 = vmatprep.subr.mxu0 0.0
  %322 = vmatpush1.msra.mxu0 0.0
  %323 = vmatprep.subr.mxu0 0.0
  %324 = vmatpush1.msra.mxu0 0.0
  %325 = vmatprep.subr.mxu0 0.0
  %326 = vmatpush1.msra.mxu0 0.0
  %327 = vmatprep.subr.mxu0 0.0
  %328 = vmatpush1.msra.mxu0 0.0
  %329 = vmatprep.subr.mxu0 0.0
  %330 = vmatpush1.msra.mxu0 0.0
  %331 = vmatprep.subr.mxu0 0.0
  %332 = vmatpush1.msra.mxu0 0.0
  %333 = vmatprep.subr.mxu0 0.0
  %334 = vmatpush1.msra.mxu0 0.0
  %335 = vmatprep.subr.mxu0 0.0
  %336 = vmatpush1.msra.mxu0 0.0
  %337 = vmatprep.subr.mxu0 0.0
  %338 = vmatpush1.msra.mxu0 0.0
  %339 = vmatprep.subr.mxu0 0.0
  %340 = vmatpush1.msra.mxu0 0.0
  %341 = vmatprep.subr.mxu0 0.0
  %342 = vmatpush1.msra.mxu0 0.0
  %343 = vmatprep.subr.mxu0 0.0
  %344 = vmatpush1.msra.mxu0 0.0
  %345 = vmatprep.subr.mxu0 0.0
  %346 = vmatpush1.msra.mxu0 0.0
  %347 = vmatprep.subr.mxu0 0.0
  %348 = vmatpush1.msra.mxu0 0.0
  %349 = vmatprep.mubr.f32.mxu0 0.0
  %350 = vmatmul.mubr.f32.gmra.mrb[0].mxu0 %v50
  %v351 = vpop.f32.mrb[0].mxu0
  %v352 = vadd.f32 %v46, %v351
  %v353 = vpop.f32.mrb[0].mxu0
  %354 = vdwg.mxu0
  %v355 = vsel %vm196, %v277, 0.0
  %356 = vadd.xlane.f32.xlu0 %v355
  %v357 = vpop.xlane.xlu0 %356
  %v358 = vadd.f32 %v204, %v357
  %v359 = vsel %vm196, %v352, 0.0
  %360 = vadd.xlane.f32.xlu0 %v359
  %v361 = vpop.xlane.xlu0 %360
  %v362 = vadd.f32 %v358, %v361
  %v363 = vrcp.pop 64.0
  %v364 = vmul.f32 %v362, %v363
  %v365 = vsub.f32 %v119, %v364
  %v366 = vsub.f32 %v193, %v364
  %v367 = vmul.f32 %v365, %v365
  %v368 = vsel %vm196, %v367, 0.0
  %369 = vadd.xlane.f32.xlu0 %v368
  %v370 = vpop.xlane.xlu0 %369
  %v371 = vadd.f32 %v370, 0.0
  %v372 = vmul.f32 %v366, %v366
  %v373 = vsel %vm196, %v372, 0.0
  %374 = vadd.xlane.f32.xlu0 %v373
  %v375 = vpop.xlane.xlu0 %374
  %v376 = vadd.f32 %v371, %v375
  %v377 = vsub.f32 %v277, %v364
  %v378 = vsub.f32 %v352, %v364
  %v379 = vmul.f32 %v377, %v377
  %v380 = vsel %vm196, %v379, 0.0
  %381 = vadd.xlane.f32.xlu0 %v380
  %v382 = vpop.xlane.xlu0 %381
  %v383 = vadd.f32 %v376, %v382
  %v384 = vmul.f32 %v378, %v378
  %v385 = vsel %vm196, %v384, 0.0
  %386 = vadd.xlane.f32.xlu0 %v385
  %v387 = vpop.xlane.xlu0 %386
  %v388 = vadd.f32 %v383, %v387
  %v389 = vmul.f32 %v388, %v363
  %v390 = vadd.f32 %v389, 1e-05
  %v391 = vrsqrt.pop %v390
  %v392 = vld [vmem:[%s4] sm:$0xf]
  %v393 = vmul.f32 %v391, %v392
  %v394 = vld [vmem:[%s5] sm:$0xf]
  %v395 = vld [vmem:[%s6] sm:$0xff]
  %v396 = vld [vmem:[%s6 + $0x8] sm:$0xff]
  %v397 = vld [vmem:[%s7] sm:$0xff]
  %v398 = vld [vmem:[%s7 + $0x8] sm:$0xff]
  %v399 = vld [vmem:[%s8] sm:$0xff]
  %v400 = vld [vmem:[%s8 + $0x8] sm:$0xff]
  %v401 = vld [vmem:[%s9] sm:$0xff]
  %v402 = vld [vmem:[%s9 + $0x8] sm:$0xff]
  %404 = vset.pattern.permute.xlu0 0
  %405 = vperm.xlu0 %404, %v393
  %v406 = vpop.permute.xlu0 %405
  %v408 = vmul.f32 %v365, %v406
  %410 = vset.pattern.permute.xlu0 0
  %411 = vperm.xlu0 %410, %v394
  %v412 = vpop.permute.xlu0 %411
  %v414 = vadd.f32 %v408, %v412
  %v415 = vmul.f32 %v366, %v406
  %v416 = vadd.f32 %v415, %v412
  %v417 = vxor.u32 %v414, 2147483648
  %v418 = vmul.f32 %v417, 1.442695
  %v419 = vpow.pop %v418
  %v420 = vadd.f32 %v419, 1.0
  %v421 = vrcp.pop %v420
  %v422 = vmul.f32 1.0, %v421
  %v423 = vmul.f32 %v414, %v422
  %v424 = vxor.u32 %v416, 2147483648
  %v425 = vmul.f32 %v424, 1.442695
  %v426 = vpow.pop %v425
  %v427 = vadd.f32 %v426, 1.0
  %v428 = vrcp.pop %v427
  %v429 = vmul.f32 1.0, %v428
  %v430 = vmul.f32 %v416, %v429
  %432 = vset.pattern.permute.xlu0 0
  %433 = vperm.xlu0 %432, %v397
  %v434 = vpop.permute.xlu0 %433
  %437 = vset.pattern.permute.xlu0 0
  %438 = vperm.xlu0 %437, %v398
  %v439 = vpop.permute.xlu0 %438
  %vm441 = vcmask 31744
  %v443 = vsel %vm441, %v395, 0
  %v446 = vsel %vm441, %v396, 0
  %vm448 = vcmask 1043456
  %v450 = vsel %vm448, %v423, 0
  %452 = vmatprep.subr.mxu0 0.0
  %453 = vmatpush1.msra.mxu0 %v450
  %454 = vmatprep.subr.mxu0 0.0
  %455 = vmatpush1.msra.mxu0 0.0
  %456 = vmatprep.subr.mxu0 0.0
  %457 = vmatpush1.msra.mxu0 0.0
  %458 = vmatprep.subr.mxu0 0.0
  %459 = vmatpush1.msra.mxu0 0.0
  %460 = vmatprep.subr.mxu0 0.0
  %461 = vmatpush1.msra.mxu0 0.0
  %462 = vmatprep.subr.mxu0 0.0
  %463 = vmatpush1.msra.mxu0 0.0
  %464 = vmatprep.subr.mxu0 0.0
  %465 = vmatpush1.msra.mxu0 0.0
  %466 = vmatprep.subr.mxu0 0.0
  %467 = vmatpush1.msra.mxu0 0.0
  %468 = vmatprep.subr.mxu0 0.0
  %469 = vmatpush1.msra.mxu0 0.0
  %470 = vmatprep.subr.mxu0 0.0
  %471 = vmatpush1.msra.mxu0 0.0
  %472 = vmatprep.subr.mxu0 0.0
  %473 = vmatpush1.msra.mxu0 0.0
  %474 = vmatprep.subr.mxu0 0.0
  %475 = vmatpush1.msra.mxu0 0.0
  %476 = vmatprep.subr.mxu0 0.0
  %477 = vmatpush1.msra.mxu0 0.0
  %478 = vmatprep.subr.mxu0 0.0
  %479 = vmatpush1.msra.mxu0 0.0
  %480 = vmatprep.subr.mxu0 0.0
  %481 = vmatpush1.msra.mxu0 0.0
  %482 = vmatprep.subr.mxu0 0.0
  %483 = vmatpush1.msra.mxu0 0.0
  %484 = vmatprep.subr.mxu0 0.0
  %485 = vmatpush1.msra.mxu0 0.0
  %486 = vmatprep.subr.mxu0 0.0
  %487 = vmatpush1.msra.mxu0 0.0
  %488 = vmatprep.subr.mxu0 0.0
  %489 = vmatpush1.msra.mxu0 0.0
  %490 = vmatprep.subr.mxu0 0.0
  %491 = vmatpush1.msra.mxu0 0.0
  %492 = vmatprep.subr.mxu0 0.0
  %493 = vmatpush1.msra.mxu0 0.0
  %494 = vmatprep.subr.mxu0 0.0
  %495 = vmatpush1.msra.mxu0 0.0
  %496 = vmatprep.subr.mxu0 0.0
  %497 = vmatpush1.msra.mxu0 0.0
  %498 = vmatprep.subr.mxu0 0.0
  %499 = vmatpush1.msra.mxu0 0.0
  %500 = vmatprep.subr.mxu0 0.0
  %501 = vmatpush1.msra.mxu0 0.0
  %502 = vmatprep.subr.mxu0 0.0
  %503 = vmatpush1.msra.mxu0 0.0
  %504 = vmatprep.subr.mxu0 0.0
  %505 = vmatpush1.msra.mxu0 0.0
  %506 = vmatprep.subr.mxu0 0.0
  %507 = vmatpush1.msra.mxu0 0.0
  %508 = vmatprep.subr.mxu0 0.0
  %509 = vmatpush1.msra.mxu0 0.0
  %510 = vmatprep.subr.mxu0 0.0
  %511 = vmatpush1.msra.mxu0 0.0
  %512 = vmatprep.subr.mxu0 0.0
  %513 = vmatpush1.msra.mxu0 0.0
  %514 = vmatprep.subr.mxu0 0.0
  %515 = vmatpush1.msra.mxu0 0.0
  %516 = vmatprep.mubr.f32.mxu0 0.0
  %517 = vmatmul.mubr.f32.gmra.mrb[0].mxu0 %v443
  %v518 = vpop.f32.mrb[0].mxu0
  %v519 = vadd.f32 %v434, %v518
  %v520 = vpop.f32.mrb[0].mxu0
  %521 = vmatprep.mubr.f32.mxu0 0.0
  %522 = vmatmul.mubr.f32.gmra.mrb[0].mxu0 %v446
  %v523 = vpop.f32.mrb[0].mxu0
  %v524 = vadd.f32 %v439, %v523
  %v525 = vpop.f32.mrb[0].mxu0
  %526 = vdwg.mxu0
  %v527 = vxor.u32 %v519, 2147483648
  %v528 = vxor.u32 %v524, 2147483648
  %v529 = vmul.f32 %v527, 1.442695
  %v530 = vpow.pop %v529
  %v531 = vmul.f32 %v528, 1.442695
  %v532 = vpow.pop %v531
  %v533 = vadd.f32 %v530, 1.0
  %v534 = vadd.f32 %v532, 1.0
  %v535 = vrcp.pop %v533
  %v536 = vmul.f32 1.0, %v535
  %v537 = vrcp.pop %v534
  %v538 = vmul.f32 1.0, %v537
  %540 = vset.pattern.permute.xlu0 0
  %541 = vperm.xlu0 %540, %v401
  %v542 = vpop.permute.xlu0 %541
  %545 = vset.pattern.permute.xlu0 0
  %546 = vperm.xlu0 %545, %v402
  %v547 = vpop.permute.xlu0 %546
  %v550 = vsel %vm441, %v399, 0
  %v553 = vsel %vm441, %v400, 0
  %v556 = vsel %vm448, %v430, 0
  %558 = vmatprep.subr.mxu0 0.0
  %559 = vmatpush1.msra.mxu0 %v556
  %560 = vmatprep.subr.mxu0 0.0
  %561 = vmatpush1.msra.mxu0 0.0
  %562 = vmatprep.subr.mxu0 0.0
  %563 = vmatpush1.msra.mxu0 0.0
  %564 = vmatprep.subr.mxu0 0.0
  %565 = vmatpush1.msra.mxu0 0.0
  %566 = vmatprep.subr.mxu0 0.0
  %567 = vmatpush1.msra.mxu0 0.0
  %568 = vmatprep.subr.mxu0 0.0
  %569 = vmatpush1.msra.mxu0 0.0
  %570 = vmatprep.subr.mxu0 0.0
  %571 = vmatpush1.msra.mxu0 0.0
  %572 = vmatprep.subr.mxu0 0.0
  %573 = vmatpush1.msra.mxu0 0.0
  %574 = vmatprep.subr.mxu0 0.0
  %575 = vmatpush1.msra.mxu0 0.0
  %576 = vmatprep.subr.mxu0 0.0
  %577 = vmatpush1.msra.mxu0 0.0
  %578 = vmatprep.subr.mxu0 0.0
  %579 = vmatpush1.msra.mxu0 0.0
  %580 = vmatprep.subr.mxu0 0.0
  %581 = vmatpush1.msra.mxu0 0.0
  %582 = vmatprep.subr.mxu0 0.0
  %583 = vmatpush1.msra.mxu0 0.0
  %584 = vmatprep.subr.mxu0 0.0
  %585 = vmatpush1.msra.mxu0 0.0
  %586 = vmatprep.subr.mxu0 0.0
  %587 = vmatpush1.msra.mxu0 0.0
  %588 = vmatprep.subr.mxu0 0.0
  %589 = vmatpush1.msra.mxu0 0.0
  %590 = vmatprep.subr.mxu0 0.0
  %591 = vmatpush1.msra.mxu0 0.0
  %592 = vmatprep.subr.mxu0 0.0
  %593 = vmatpush1.msra.mxu0 0.0
  %594 = vmatprep.subr.mxu0 0.0
  %595 = vmatpush1.msra.mxu0 0.0
  %596 = vmatprep.subr.mxu0 0.0
  %597 = vmatpush1.msra.mxu0 0.0
  %598 = vmatprep.subr.mxu0 0.0
  %599 = vmatpush1.msra.mxu0 0.0
  %600 = vmatprep.subr.mxu0 0.0
  %601 = vmatpush1.msra.mxu0 0.0
  %602 = vmatprep.subr.mxu0 0.0
  %603 = vmatpush1.msra.mxu0 0.0
  %604 = vmatprep.subr.mxu0 0.0
  %605 = vmatpush1.msra.mxu0 0.0
  %606 = vmatprep.subr.mxu0 0.0
  %607 = vmatpush1.msra.mxu0 0.0
  %608 = vmatprep.subr.mxu0 0.0
  %609 = vmatpush1.msra.mxu0 0.0
  %610 = vmatprep.subr.mxu0 0.0
  %611 = vmatpush1.msra.mxu0 0.0
  %612 = vmatprep.subr.mxu0 0.0
  %613 = vmatpush1.msra.mxu0 0.0
  %614 = vmatprep.subr.mxu0 0.0
  %615 = vmatpush1.msra.mxu0 0.0
  %616 = vmatprep.subr.mxu0 0.0
  %617 = vmatpush1.msra.mxu0 0.0
  %618 = vmatprep.subr.mxu0 0.0
  %619 = vmatpush1.msra.mxu0 0.0
  %620 = vmatprep.subr.mxu0 0.0
  %621 = vmatpush1.msra.mxu0 0.0
  %622 = vmatprep.mubr.f32.mxu0 0.0
  %623 = vmatmul.mubr.f32.gmra.mrb[0].mxu0 %v550
  %v624 = vpop.f32.mrb[0].mxu0
  %v625 = vadd.f32 %v542, %v624
  %v626 = vpop.f32.mrb[0].mxu0
  %627 = vmatprep.mubr.f32.mxu0 0.0
  %628 = vmatmul.mubr.f32.gmra.mrb[0].mxu0 %v553
  %v629 = vpop.f32.mrb[0].mxu0
  %v630 = vadd.f32 %v547, %v629
  %v631 = vpop.f32.mrb[0].mxu0
  %632 = vdwg.mxu0
  %v633 = vxor.u32 %v625, 2147483648
  %v634 = vxor.u32 %v630, 2147483648
  %v635 = vmul.f32 %v633, 1.442695
  %v636 = vpow.pop %v635
  %v637 = vmul.f32 %v634, 1.442695
  %v638 = vpow.pop %v637
  %v639 = vadd.f32 %v636, 1.0
  %v640 = vadd.f32 %v638, 1.0
  %v641 = vrcp.pop %v639
  %v642 = vmul.f32 1.0, %v641
  %v643 = vrcp.pop %v640
  %v644 = vmul.f32 1.0, %v643
  %645 = vst.msk [vmem:[%s10] sm:$0xff] %vm48, %v536
  %646 = vst.msk [vmem:[%s10 + $0x8] sm:$0xff] %vm48, %v538
  %647 = vst.msk [vmem:[%s11] sm:$0xff] %vm48, %v642
  %648 = vst.msk [vmem:[%s11 + $0x8] sm:$0xff] %vm48, %v644
  %v649 = vmul.f32 %v377, %v406
  %v650 = vadd.f32 %v649, %v412
  %v651 = vmul.f32 %v378, %v406
  %v652 = vadd.f32 %v651, %v412
  %v653 = vxor.u32 %v650, 2147483648
  %v654 = vmul.f32 %v653, 1.442695
  %v655 = vpow.pop %v654
  %v656 = vadd.f32 %v655, 1.0
  %v657 = vrcp.pop %v656
  %v658 = vmul.f32 1.0, %v657
  %v659 = vmul.f32 %v650, %v658
  %v660 = vxor.u32 %v652, 2147483648
  %v661 = vmul.f32 %v660, 1.442695
  %v662 = vpow.pop %v661
  %v663 = vadd.f32 %v662, 1.0
  %v664 = vrcp.pop %v663
  %v665 = vmul.f32 1.0, %v664
  %v666 = vmul.f32 %v652, %v665
  %v668 = vsel %vm448, %v659, 0
  %670 = vmatprep.subr.mxu0 0.0
  %671 = vmatpush1.msra.mxu0 %v668
  %672 = vmatprep.subr.mxu0 0.0
  %673 = vmatpush1.msra.mxu0 0.0
  %674 = vmatprep.subr.mxu0 0.0
  %675 = vmatpush1.msra.mxu0 0.0
  %676 = vmatprep.subr.mxu0 0.0
  %677 = vmatpush1.msra.mxu0 0.0
  %678 = vmatprep.subr.mxu0 0.0
  %679 = vmatpush1.msra.mxu0 0.0
  %680 = vmatprep.subr.mxu0 0.0
  %681 = vmatpush1.msra.mxu0 0.0
  %682 = vmatprep.subr.mxu0 0.0
  %683 = vmatpush1.msra.mxu0 0.0
  %684 = vmatprep.subr.mxu0 0.0
  %685 = vmatpush1.msra.mxu0 0.0
  %686 = vmatprep.subr.mxu0 0.0
  %687 = vmatpush1.msra.mxu0 0.0
  %688 = vmatprep.subr.mxu0 0.0
  %689 = vmatpush1.msra.mxu0 0.0
  %690 = vmatprep.subr.mxu0 0.0
  %691 = vmatpush1.msra.mxu0 0.0
  %692 = vmatprep.subr.mxu0 0.0
  %693 = vmatpush1.msra.mxu0 0.0
  %694 = vmatprep.subr.mxu0 0.0
  %695 = vmatpush1.msra.mxu0 0.0
  %696 = vmatprep.subr.mxu0 0.0
  %697 = vmatpush1.msra.mxu0 0.0
  %698 = vmatprep.subr.mxu0 0.0
  %699 = vmatpush1.msra.mxu0 0.0
  %700 = vmatprep.subr.mxu0 0.0
  %701 = vmatpush1.msra.mxu0 0.0
  %702 = vmatprep.subr.mxu0 0.0
  %703 = vmatpush1.msra.mxu0 0.0
  %704 = vmatprep.subr.mxu0 0.0
  %705 = vmatpush1.msra.mxu0 0.0
  %706 = vmatprep.subr.mxu0 0.0
  %707 = vmatpush1.msra.mxu0 0.0
  %708 = vmatprep.subr.mxu0 0.0
  %709 = vmatpush1.msra.mxu0 0.0
  %710 = vmatprep.subr.mxu0 0.0
  %711 = vmatpush1.msra.mxu0 0.0
  %712 = vmatprep.subr.mxu0 0.0
  %713 = vmatpush1.msra.mxu0 0.0
  %714 = vmatprep.subr.mxu0 0.0
  %715 = vmatpush1.msra.mxu0 0.0
  %716 = vmatprep.subr.mxu0 0.0
  %717 = vmatpush1.msra.mxu0 0.0
  %718 = vmatprep.subr.mxu0 0.0
  %719 = vmatpush1.msra.mxu0 0.0
  %720 = vmatprep.subr.mxu0 0.0
  %721 = vmatpush1.msra.mxu0 0.0
  %722 = vmatprep.subr.mxu0 0.0
  %723 = vmatpush1.msra.mxu0 0.0
  %724 = vmatprep.subr.mxu0 0.0
  %725 = vmatpush1.msra.mxu0 0.0
  %726 = vmatprep.subr.mxu0 0.0
  %727 = vmatpush1.msra.mxu0 0.0
  %728 = vmatprep.subr.mxu0 0.0
  %729 = vmatpush1.msra.mxu0 0.0
  %730 = vmatprep.subr.mxu0 0.0
  %731 = vmatpush1.msra.mxu0 0.0
  %732 = vmatprep.subr.mxu0 0.0
  %733 = vmatpush1.msra.mxu0 0.0
  %734 = vmatprep.mubr.f32.mxu0 0.0
  %735 = vmatmul.mubr.f32.gmra.mrb[0].mxu0 %v443
  %v736 = vpop.f32.mrb[0].mxu0
  %v737 = vadd.f32 %v434, %v736
  %v738 = vpop.f32.mrb[0].mxu0
  %739 = vmatprep.mubr.f32.mxu0 0.0
  %740 = vmatmul.mubr.f32.gmra.mrb[0].mxu0 %v446
  %v741 = vpop.f32.mrb[0].mxu0
  %v742 = vadd.f32 %v439, %v741
  %v743 = vpop.f32.mrb[0].mxu0
  %744 = vdwg.mxu0
  %v745 = vxor.u32 %v737, 2147483648
  %v746 = vxor.u32 %v742, 2147483648
  %v747 = vmul.f32 %v745, 1.442695
  %v748 = vpow.pop %v747
  %v749 = vmul.f32 %v746, 1.442695
  %v750 = vpow.pop %v749
  %v751 = vadd.f32 %v748, 1.0
  %v752 = vadd.f32 %v750, 1.0
  %v753 = vrcp.pop %v751
  %v754 = vmul.f32 1.0, %v753
  %v755 = vrcp.pop %v752
  %v756 = vmul.f32 1.0, %v755
  %v758 = vsel %vm448, %v666, 0
  %760 = vmatprep.subr.mxu0 0.0
  %761 = vmatpush1.msra.mxu0 %v758
  %762 = vmatprep.subr.mxu0 0.0
  %763 = vmatpush1.msra.mxu0 0.0
  %764 = vmatprep.subr.mxu0 0.0
  %765 = vmatpush1.msra.mxu0 0.0
  %766 = vmatprep.subr.mxu0 0.0
  %767 = vmatpush1.msra.mxu0 0.0
  %768 = vmatprep.subr.mxu0 0.0
  %769 = vmatpush1.msra.mxu0 0.0
  %770 = vmatprep.subr.mxu0 0.0
  %771 = vmatpush1.msra.mxu0 0.0
  %772 = vmatprep.subr.mxu0 0.0
  %773 = vmatpush1.msra.mxu0 0.0
  %774 = vmatprep.subr.mxu0 0.0
  %775 = vmatpush1.msra.mxu0 0.0
  %776 = vmatprep.subr.mxu0 0.0
  %777 = vmatpush1.msra.mxu0 0.0
  %778 = vmatprep.subr.mxu0 0.0
  %779 = vmatpush1.msra.mxu0 0.0
  %780 = vmatprep.subr.mxu0 0.0
  %781 = vmatpush1.msra.mxu0 0.0
  %782 = vmatprep.subr.mxu0 0.0
  %783 = vmatpush1.msra.mxu0 0.0
  %784 = vmatprep.subr.mxu0 0.0
  %785 = vmatpush1.msra.mxu0 0.0
  %786 = vmatprep.subr.mxu0 0.0
  %787 = vmatpush1.msra.mxu0 0.0
  %788 = vmatprep.subr.mxu0 0.0
  %789 = vmatpush1.msra.mxu0 0.0
  %790 = vmatprep.subr.mxu0 0.0
  %791 = vmatpush1.msra.mxu0 0.0
  %792 = vmatprep.subr.mxu0 0.0
  %793 = vmatpush1.msra.mxu0 0.0
  %794 = vmatprep.subr.mxu0 0.0
  %795 = vmatpush1.msra.mxu0 0.0
  %796 = vmatprep.subr.mxu0 0.0
  %797 = vmatpush1.msra.mxu0 0.0
  %798 = vmatprep.subr.mxu0 0.0
  %799 = vmatpush1.msra.mxu0 0.0
  %800 = vmatprep.subr.mxu0 0.0
  %801 = vmatpush1.msra.mxu0 0.0
  %802 = vmatprep.subr.mxu0 0.0
  %803 = vmatpush1.msra.mxu0 0.0
  %804 = vmatprep.subr.mxu0 0.0
  %805 = vmatpush1.msra.mxu0 0.0
  %806 = vmatprep.subr.mxu0 0.0
  %807 = vmatpush1.msra.mxu0 0.0
  %808 = vmatprep.subr.mxu0 0.0
  %809 = vmatpush1.msra.mxu0 0.0
  %810 = vmatprep.subr.mxu0 0.0
  %811 = vmatpush1.msra.mxu0 0.0
  %812 = vmatprep.subr.mxu0 0.0
  %813 = vmatpush1.msra.mxu0 0.0
  %814 = vmatprep.subr.mxu0 0.0
  %815 = vmatpush1.msra.mxu0 0.0
  %816 = vmatprep.subr.mxu0 0.0
  %817 = vmatpush1.msra.mxu0 0.0
  %818 = vmatprep.subr.mxu0 0.0
  %819 = vmatpush1.msra.mxu0 0.0
  %820 = vmatprep.subr.mxu0 0.0
  %821 = vmatpush1.msra.mxu0 0.0
  %822 = vmatprep.subr.mxu0 0.0
  %823 = vmatpush1.msra.mxu0 0.0
  %824 = vmatprep.mubr.f32.mxu0 0.0
  %825 = vmatmul.mubr.f32.gmra.mrb[0].mxu0 %v550
  %v826 = vpop.f32.mrb[0].mxu0
  %v827 = vadd.f32 %v542, %v826
  %v828 = vpop.f32.mrb[0].mxu0
  %829 = vmatprep.mubr.f32.mxu0 0.0
  %830 = vmatmul.mubr.f32.gmra.mrb[0].mxu0 %v553
  %v831 = vpop.f32.mrb[0].mxu0
  %v832 = vadd.f32 %v547, %v831
  %v833 = vpop.f32.mrb[0].mxu0
  %834 = vdwg.mxu0
  %v835 = vxor.u32 %v827, 2147483648
  %v836 = vxor.u32 %v832, 2147483648
  %v837 = vmul.f32 %v835, 1.442695
  %v838 = vpow.pop %v837
  %v839 = vmul.f32 %v836, 1.442695
  %v840 = vpow.pop %v839
  %v841 = vadd.f32 %v838, 1.0
  %v842 = vadd.f32 %v840, 1.0
  %v843 = vrcp.pop %v841
  %v844 = vmul.f32 1.0, %v843
  %v845 = vrcp.pop %v842
  %v846 = vmul.f32 1.0, %v845
  %s847 = scalar_lea.vmem %s10, 16
  %848 = vst.msk [vmem:[%s847] sm:$0xff] %vm48, %v754
  %849 = vst.msk [vmem:[%s847 + $0x8] sm:$0xff] %vm48, %v756
  %s850 = scalar_lea.vmem %s11, 16
  %851 = vst.msk [vmem:[%s850] sm:$0xff] %vm48, %v844
  %852 = vst.msk [vmem:[%s850 + $0x8] sm:$0xff] %vm48, %v846
  // Predicated region
  $region42: #{ca_forward.4} parent=0 // pred_check
    _
  $region43: #{ca_forward.4} parent=0 // pred_check_branch
    %854 = sbr.rel (0) target = $region45
  $region44: #{ca_forward.4} parent=0 // pred_region
    _
  $region45: #{ca_forward.4} parent=0 // pred_fallthru
    _
  // Predicated region
  $region46: #{ca_forward.4} parent=0 // pred_check
    _
  $region47: #{ca_forward.4} parent=0 // pred_check_branch
    %856 = sbr.rel (0) target = $region49
  $region48: #{ca_forward.4} parent=0 // pred_region
    _
  $region49: #{ca_forward.4} parent=0 // pred_fallthru
    _
  // Predicated region
  $region50: #{ca_forward.4} parent=0 // pred_check
    _
  $region51: #{ca_forward.4} parent=0 // pred_check_branch
    %858 = sbr.rel (0) target = $region53
  $region52: #{ca_forward.4} parent=0 // pred_region
    _
  $region53: #{ca_forward.4} parent=0 // pred_fallthru
    _
  // Predicated region
  $region54: #{ca_forward.4} parent=0 // pred_check
    _
  $region55: #{ca_forward.4} parent=0 // pred_check_branch
    %860 = sbr.rel (0) target = $region57
  $region56: #{ca_forward.4} parent=0 // pred_region
    _
  $region57: #{ca_forward.4} parent=0 // pred_fallthru
    _

</llo_original>
